<compile_context>
chip_gen: v7x
topology: tpu7x:2x2x1
jax: 0.10.0
libtpu: 0.0.40
codegen_flags: <defaults>
</compile_context>

<pallas_src>
import functools

import jax
import jax.numpy as jnp
import numpy as np
from jax import lax
from jax.experimental import pallas as pl
from jax.experimental.pallas import tpu as pltpu


# ----------------------------------------------------------------------------------
# Pallas kernel: grid = (batch, expert).  Routing at e==0, one expert's FFN per step.
# ----------------------------------------------------------------------------------
def _moe_kernel(x_ref, wg_ref, w1_ref, w2_ref, tri_ref, out_ref,
                xbf_sc, disp_sc, comb_sc, gate_sc, acc_sc,
                *, capacity, cap_pad, threshold, eps, neg_slope):
    f32, bf16 = jnp.float32, jnp.bfloat16
    e = pl.program_id(1)
    n_e = pl.num_programs(1)
    _, N, D = x_ref.shape
    E = wg_ref.shape[1]
    Cp = cap_pad                      # sublane-padded capacity; extra slots stay empty
    C = float(capacity)               # semantic capacity (same formula as PyTorch)

    # ------------------------------------------------------------------
    # e == 0: gating + top-2 threshold routing for this batch element.
    # Results are written to VMEM scratch consumed by every expert step.
    # ------------------------------------------------------------------
    @pl.when(e == 0)
    def _routing():
        x = x_ref[0].astype(f32)                                           # (N, D)
        xbf_sc[...] = x.astype(bf16)

        # softmax gating — fully f32 so routing decisions match the f32 reference.
        logits = jnp.dot(x, wg_ref[...], preferred_element_type=f32)       # (N, E)
        logits = logits - jnp.max(logits, axis=-1, keepdims=True)
        exp_l = jnp.exp(logits)
        raw = exp_l / jnp.sum(exp_l, axis=-1, keepdims=True)

        e_iota = lax.broadcasted_iota(jnp.int32, (N, E), 1)

        # top-1 (lowest index on exact ties == argmax)
        g1 = jnp.max(raw, axis=-1, keepdims=True)
        idx1 = jnp.min(jnp.where(raw >= g1, e_iota, E), axis=-1, keepdims=True)
        mask1 = (e_iota == idx1).astype(f32)

        # top-2 (excluding top-1)
        wo = raw * (1.0 - mask1)
        g2 = jnp.max(wo, axis=-1, keepdims=True)
        idx2 = jnp.min(jnp.where(wo >= g2, e_iota, E), axis=-1, keepdims=True)
        mask2 = (e_iota == idx2).astype(f32)

        # NOTE: g2 is normalized with the *already updated* g1 — mirrors the PyTorch
        # module's update-ordering quirk; do not "fix".
        g1n = g1 / (g1 + g2 + eps)
        g2n = g2 / (g1n + g2 + eps)
        mask2 = mask2 * (g2n > threshold).astype(f32)

        # Capacity bookkeeping: both exclusive token cumsums fused into one bf16
        # (N,N)@(N,2E) matmul.  0/1 operands are exact in bf16 and the f32
        # accumulator keeps positions exact -> bit-identical to the f32 path.
        tri = tri_ref[...]                                                 # (N, N) bf16
        m12 = jnp.concatenate([mask1, mask2], axis=1).astype(bf16)         # (N, 2E)
        pos12 = jnp.dot(tri, m12, preferred_element_type=f32)              # (N, 2E)

        pos1 = pos12[:, :E] * mask1
        mask1 = mask1 * (pos1 < C).astype(f32)
        m1f = jnp.sum(mask1, axis=-1, keepdims=True)                       # (N, 1)
        pos1_s = jnp.sum(pos1, axis=-1, keepdims=True)
        g1n = g1n * m1f

        m1count = jnp.sum(mask1, axis=0, keepdims=True)                    # (1, E)
        pos2 = (pos12[:, E:] + m1count) * mask2
        mask2 = mask2 * (pos2 < C).astype(f32)
        m2f = jnp.sum(mask2, axis=-1, keepdims=True)
        pos2_s = jnp.sum(pos2, axis=-1, keepdims=True)
        g2n = g2n * m2f

        # flattened (expert, capacity-slot) index and effective per-token gates
        comb1 = idx1 * Cp + pos1_s.astype(jnp.int32)                       # (N, 1)
        comb2 = idx2 * Cp + pos2_s.astype(jnp.int32)
        val1 = g1n * m1f          # 0 when the token was dropped / over capacity
        val2 = g2n * m2f

        # combine mask, token-major layout (E, N, Cp): exact 0/1 in bf16
        slot_c = (lax.broadcasted_iota(jnp.int32, (E, N, Cp), 0) * Cp
                  + lax.broadcasted_iota(jnp.int32, (E, N, Cp), 2))
        sel1_c = (slot_c == comb1.reshape(1, N, 1)) & (val1 != 0.0).reshape(1, N, 1)
        sel2_c = (slot_c == comb2.reshape(1, N, 1)) & (val2 != 0.0).reshape(1, N, 1)
        comb_sc[...] = (sel1_c | sel2_c).astype(bf16)

        # dispatch mask, slot-major layout (E, Cp, N): built directly transposed so
        # the per-expert dispatch matmul needs no relayout.  The per-token scalars
        # are moved to lane layout with one small packed (N,4) transpose at init.
        packed = jnp.concatenate(
            [comb1.astype(f32), comb2.astype(f32), val1, val2], axis=1)    # (N, 4)
        packed_t = packed.T                                                # (4, N)
        comb1_t = packed_t[0:1, :].astype(jnp.int32).reshape(1, 1, N)
        comb2_t = packed_t[1:2, :].astype(jnp.int32).reshape(1, 1, N)
        val1_t = packed_t[2:3, :].reshape(1, 1, N)
        val2_t = packed_t[3:4, :].reshape(1, 1, N)

        slot_d = (lax.broadcasted_iota(jnp.int32, (E, Cp, N), 0) * Cp
                  + lax.broadcasted_iota(jnp.int32, (E, Cp, N), 1))
        sel1_d = (slot_d == comb1_t) & (val1_t != 0.0)
        sel2_d = (slot_d == comb2_t) & (val2_t != 0.0)
        disp_sc[...] = (sel1_d | sel2_d).astype(bf16)

        # per-slot gate (each capacity slot holds at most one token), kept f32 so
        # gate weights are applied on the VPU and never rounded to bf16.
        gate_sc[...] = (jnp.sum(jnp.where(sel1_d, val1_t, 0.0), axis=2, keepdims=True)
                        + jnp.sum(jnp.where(sel2_d, val2_t, 0.0), axis=2, keepdims=True))

        acc_sc[...] = jnp.zeros_like(acc_sc)

    # ------------------------------------------------------------------
    # every step: dispatch -> this expert's FFN -> gated combine-accumulate.
    # The next expert's weights are DMA'd in the background (double buffering).
    # ------------------------------------------------------------------
    w1e = w1_ref[0]                                                        # (D, H) bf16
    w2e = w2_ref[0]                                                        # (H, D) bf16

    xi = jnp.dot(disp_sc[e], xbf_sc[...], preferred_element_type=f32)      # (Cp, D)
    h = jnp.dot(xi.astype(bf16), w1e, preferred_element_type=f32)          # (Cp, H)
    h = jnp.where(h >= 0.0, h, neg_slope * h)                              # LeakyReLU (f32)
    eo = jnp.dot(h.astype(bf16), w2e, preferred_element_type=f32)          # (Cp, D)
    eo = eo * gate_sc[e]                                                   # f32 gates (VPU)
    acc_sc[...] += jnp.dot(comb_sc[e], eo.astype(bf16),
                           preferred_element_type=f32)                     # (N, D)

    @pl.when(e == n_e - 1)
    def _finalize():
        out_ref[0] = acc_sc[...].astype(out_ref.dtype)


# ----------------------------------------------------------------------------------
# Wrapper
# ----------------------------------------------------------------------------------
def moe_forward(x, gating_w, w1, w2, *, threshold=0.2, eps=1e-9,
                capacity_factor=1.25, min_expert=4, neg_slope=0.01):
    """Pallas MoE forward.  x: (B, N, D).  Training-mode capacity factor (1.25)."""
    B, N, D = x.shape
    E = gating_w.shape[1]
    H = w1.shape[-1]
    assert N < (1 << 24), "token-position cumsum relies on exact f32 integer accumulation"

    # expert_capacity is a Python int in the PyTorch code as well -> static here.
    capacity = max(min(N, int(N * capacity_factor / E)), min_expert)
    cap_pad = max(8, ((capacity + 7) // 8) * 8)      # sublane-align the dispatch slots

    # grid-invariant strictly-lower-triangular matrix for the exclusive token cumsum
    # (bf16: 0/1 entries exact; matmul accumulates in f32 -> exact positions).
    tri = (jnp.arange(N, dtype=jnp.int32)[:, None]
           > jnp.arange(N, dtype=jnp.int32)[None, :]).astype(jnp.bfloat16)

    gating_w = gating_w.astype(jnp.float32)
    w1_bf = w1.astype(jnp.bfloat16)    # bf16 expert weights: half DMA/VMEM, MXU bf16 path
    w2_bf = w2.astype(jnp.bfloat16)

    kernel = functools.partial(_moe_kernel, capacity=capacity, cap_pad=cap_pad,
                               threshold=threshold, eps=eps, neg_slope=neg_slope)

    # ---- explicit VMEM budget (defaults are only 16/32 MiB scoped) ----------------
    def lanes(n):
        return ((n + 127) // 128) * 128
    est = (2 * N * lanes(D) * 4 + 2 * N * lanes(D) * 4   # x / out blocks (double-buffered)
           + N * lanes(D) * 2 + N * lanes(D) * 4          # xbf + accumulator scratch
           + D * lanes(E) * 4 + N * lanes(N) * 2          # gating weights + tri
           + 2 * 2 * D * H * 2                            # w1 + w2 (one expert, 2 bufs each)
           + E * cap_pad * lanes(N) * 2                   # dispatch-mask scratch
           + E * N * lanes(cap_pad) * 2                   # combine-mask scratch
           + E * cap_pad * 128 * 4)                       # per-slot gate scratch
    vmem_limit = max(32 << 20, min(100 << 20, 2 * est + (8 << 20)))
    try:   # cap at ~85% of physical per-core VMEM when the query API is available;
           # this is a capability probe only — it never masks a build/compile error.
        phys = getattr(pltpu.get_tpu_info(), "vmem_capacity_bytes", None)
        if phys:
            vmem_limit = min(vmem_limit, int(phys * 0.85))
    except Exception:
        pass

    flops = B * (2 * N * D * E                       # gating
                 + 2 * N * N * (2 * E)               # fused capacity cumsum
                 + E * (2 * cap_pad * N * D          # dispatch
                        + 4 * cap_pad * D * H        # expert FFN (two layers)
                        + 2 * N * cap_pad * D))      # combine
    cost = pl.CostEstimate(
        flops=flops,
        transcendentals=B * N * E,
        bytes_accessed=(2 * B * N * D * 4 + D * E * 4 + N * N * 2
                        + B * 2 * E * D * H * 2))

    scratch_shapes = [
        pltpu.VMEM((N, D), jnp.bfloat16),             # x in bf16 (dispatch RHS)
        pltpu.VMEM((E, cap_pad, N), jnp.bfloat16),    # dispatch mask (slot-major)
        pltpu.VMEM((E, N, cap_pad), jnp.bfloat16),    # combine mask (token-major)
        pltpu.VMEM((E, cap_pad, 1), jnp.float32),     # per-slot gates (f32)
        pltpu.VMEM((N, D), jnp.float32),              # output accumulator
    ]

    def build(single_buffer_invariants):
        # Grid-invariant blocks (gating weights, tri) don't need a second pipeline
        # buffer; the streamed expert weights keep the default double buffering so
        # the next expert's weight DMA overlaps the current expert's FFN.
        inv = dict(pipeline_mode=pl.Buffered(1)) if single_buffer_invariants else {}
        grid_spec = pltpu.PrefetchScalarGridSpec(
            num_scalar_prefetch=0,
            grid=(B, E),
            in_specs=[
                pl.BlockSpec((1, N, D), lambda b, e: (b, 0, 0)),           # x (per batch)
                pl.BlockSpec((D, E), lambda b, e: (0, 0), **inv),          # gating weights
                pl.BlockSpec((1, D, H), lambda b, e: (e, 0, 0)),           # expert layer1
                pl.BlockSpec((1, H, D), lambda b, e: (e, 0, 0)),           # expert layer2
                pl.BlockSpec((N, N), lambda b, e: (0, 0), **inv),          # tri (cumsum)
            ],
            out_specs=pl.BlockSpec((1, N, D), lambda b, e: (b, 0, 0)),
            scratch_shapes=scratch_shapes,
        )
        return pl.pallas_call(
            kernel,
            out_shape=jax.ShapeDtypeStruct((B, N, D), x.dtype),
            grid_spec=grid_spec,
            compiler_params=pltpu.CompilerParams(
                dimension_semantics=("parallel", "arbitrary"),
                vmem_limit_bytes=int(vmem_limit)),
            cost_estimate=cost,
        )

    args = (x, gating_w, w1_bf, w2_bf, tri)
    try:
        return build(True)(*args)
    except (TypeError, NotImplementedError, ValueError):
        # Narrow fallback: only the exceptions a rejected pipeline_mode=pl.Buffered(1)
        # can raise.  Genuine compile/VMEM errors propagate instead of being retried.
        return build(False)(*args)


# ----------------------------------------------------------------------------------
# Pure-JAX reference (mirrors the PyTorch forward exactly, all-f32) for correctness.
# ----------------------------------------------------------------------------------
def moe_reference(x, wg, w1, w2, *, threshold=0.2, eps=1e-9,
                  capacity_factor=1.25, min_expert=4, neg_slope=0.01):
    B, N, D = x.shape
    E = wg.shape[1]
    C = max(min(N, int(N * capacity_factor / E)), min_expert)

    raw = jax.nn.softmax(jnp.einsum('bnd,de->bne', x, wg), axis=-1)
    g1 = jnp.max(raw, -1)
    i1 = jnp.argmax(raw, -1)
    m1 = jax.nn.one_hot(i1, E, dtype=raw.dtype)
    wo = raw * (1.0 - m1)
    g2 = jnp.max(wo, -1)
    i2 = jnp.argmax(wo, -1)
    m2 = jax.nn.one_hot(i2, E, dtype=raw.dtype)
    g1 = g1 / (g1 + g2 + eps)
    g2 = g2 / (g1 + g2 + eps)           # uses updated g1 (PyTorch ordering quirk)
    m2 = m2 * (g2 > threshold)[..., None]

    excl = lambda m: jnp.cumsum(m, axis=-2) - m
    p1 = excl(m1) * m1
    m1 = m1 * (p1 < C)
    m1f = m1.sum(-1)
    p1s = p1.sum(-1)
    g1 = g1 * m1f
    m1c = m1.sum(-2, keepdims=True)
    p2 = (excl(m2) + m1c) * m2
    m2 = m2 * (p2 < C)
    m2f = m2.sum(-1)
    p2s = p2.sum(-1)
    g2 = g2 * m2f

    rt1 = (g1 * m1f)[..., None, None] * jax.nn.one_hot(i1, E)[..., None] \
        * jax.nn.one_hot(p1s.astype(jnp.int32), C)[..., None, :]
    rt2 = (g2 * m2f)[..., None, None] * jax.nn.one_hot(i2, E)[..., None] \
        * jax.nn.one_hot(p2s.astype(jnp.int32), C)[..., None, :]
    routing = rt1 + rt2                                          # (B, N, E, C)
    rb = (routing != 0).astype(x.dtype)

    ei = jnp.einsum('bnd,bnec->ebcd', x, rb).reshape(E, B * C, D)
    h = jnp.einsum('end,edh->enh', ei, w1)
    h = jnp.where(h >= 0.0, h, neg_slope * h)
    eo = jnp.einsum('enh,ehd->end', h, w2).reshape(E, B, C, D)
    return jnp.einsum('ebcd,bnec->bnd', eo, routing)


# ----------------------------------------------------------------------------------
if __name__ == "__main__":
    B, N, D = 2, 8, 32          # batch, group_size (tokens), model dim
    E = 6                       # num_experts / num_gates
    H = 4 * D                   # expert hidden dim

    key = jax.random.PRNGKey(0)
    kx, kg, k1, k2 = jax.random.split(key, 4)
    x = jax.random.normal(kx, (B, N, D), dtype=jnp.float32)
    gating_w = 0.1 * jax.random.normal(kg, (D, E), dtype=jnp.float32)
    w1 = 0.02 * jax.random.normal(k1, (E, D, H), dtype=jnp.float32)
    w2 = 0.02 * jax.random.normal(k2, (E, H, D), dtype=jnp.float32)

    out = jax.block_until_ready(moe_forward(x, gating_w, w1, w2))
    ref = jax.block_until_ready(moe_reference(x, gating_w, w1, w2))

    # Kernel uses bf16 MXU operands with f32 accumulation; routing decisions and the
    # gate weights stay f32, so compare against the all-f32 reference.
    np.testing.assert_allclose(np.asarray(out), np.asarray(ref), rtol=3e-2, atol=2e-3)

    print("KERNEL_OK")
</pallas_src>

<mosaic_0001>
module attributes {stable_mosaic.version = 11 : i64} {
  func.func @_moe_kernel(%arg0: i32, %arg1: i32, %arg2: memref<1x8x32xf32, #tpu.memory_space<vmem>>, %arg3: memref<32x6xf32, #tpu.memory_space<vmem>>, %arg4: memref<1x32x128xbf16, #tpu.memory_space<vmem>>, %arg5: memref<1x128x32xbf16, #tpu.memory_space<vmem>>, %arg6: memref<8x8xbf16, #tpu.memory_space<vmem>>, %arg7: memref<1x8x32xf32, #tpu.memory_space<vmem>>, %arg8: memref<8x32xbf16, #tpu.memory_space<vmem>>, %arg9: memref<6x8x8xbf16, #tpu.memory_space<vmem>>, %arg10: memref<6x8x8xbf16, #tpu.memory_space<vmem>>, %arg11: memref<6x8x1xf32, #tpu.memory_space<vmem>>, %arg12: memref<8x32xf32, #tpu.memory_space<vmem>>) attributes {dimension_semantics = [#tpu.dimension_semantics<parallel>, #tpu.dimension_semantics<arbitrary>], iteration_bounds = array<i64: 2, 6>, scalar_prefetch = 0 : i64, scratch_operands = 5 : i64, tpu.core_type = #tpu.core_type<tc>, window_params = [{transform_indices = @transform_0, window_bounds = array<i64: 1, 8, 32>}, {pipeline_mode = #tpu.pipeline_mode<synchronous>, transform_indices = @transform_1, window_bounds = array<i64: 32, 6>}, {transform_indices = @transform_2, window_bounds = array<i64: 1, 32, 128>}, {transform_indices = @transform_3, window_bounds = array<i64: 1, 128, 32>}, {pipeline_mode = #tpu.pipeline_mode<synchronous>, transform_indices = @transform_4, window_bounds = array<i64: 8, 8>}, {transform_indices = @transform_5, window_bounds = array<i64: 1, 8, 32>}]} {
    %c0_i32 = arith.constant 0 : i32
    %0 = arith.cmpi eq, %arg1, %c0_i32 : i32
    %1 = arith.extui %0 : i1 to i32
    %c0_i32_0 = arith.constant 0 : i32
    %2 = arith.cmpi ne, %1, %c0_i32_0 : i32
    scf.if %2 {
      %c0_24 = arith.constant 0 : index
      %c0_25 = arith.constant 0 : index
      %c0_26 = arith.constant 0 : index
      %37 = vector.load %arg2[%c0_24, %c0_25, %c0_26] : memref<1x8x32xf32, #tpu.memory_space<vmem>>, vector<1x8x32xf32>
      %38 = vector.shape_cast %37 : vector<1x8x32xf32> to vector<8x32xf32>
      %39 = arith.truncf %38 : vector<8x32xf32> to vector<8x32xbf16>
      %c0_27 = arith.constant 0 : index
      %c0_28 = arith.constant 0 : index
      %40 = vector.load %arg8[%c0_27, %c0_28] : memref<8x32xbf16, #tpu.memory_space<vmem>>, vector<8x32xbf16>
      tpu.vector_store %arg8[%c0_27, %c0_28], %39 {strides = array<i32>} : memref<8x32xbf16, #tpu.memory_space<vmem>>, vector<8x32xbf16>,
      %c0_29 = arith.constant 0 : index
      %c0_30 = arith.constant 0 : index
      %41 = vector.load %arg3[%c0_29, %c0_30] : memref<32x6xf32, #tpu.memory_space<vmem>>, vector<32x6xf32>
      %cst_31 = arith.constant dense<0.000000e+00> : vector<8x6xf32>
      %42 = tpu.matmul %38, %41, %cst_31 {dimension_numbers = #tpu.dot_dimension_numbers<[1], [0], [0], [1], [0, 0, 1, 1], [], []>} : vector<8x32xf32>, vector<32x6xf32>, vector<8x6xf32> -> vector<8x6xf32>
      %cst_32 = arith.constant dense<0xFF800000> : vector<8xf32>
      %43 = vector.multi_reduction <maximumf>, %42, %cst_32 [1] : vector<8x6xf32> to vector<8xf32>
      %44 = vector.shape_cast %43 : vector<8xf32> to vector<8x1xf32>
      %45 = vector.broadcast %44 : vector<8x1xf32> to vector<8x6xf32>
      %46 = arith.subf %42, %45 : vector<8x6xf32>
      %47 = math.exp %46 : vector<8x6xf32>
      %cst_33 = arith.constant dense<0.000000e+00> : vector<8xf32>
      %48 = vector.multi_reduction <add>, %47, %cst_33 [1] : vector<8x6xf32> to vector<8xf32>
      %49 = vector.shape_cast %48 : vector<8xf32> to vector<8x1xf32>
      %50 = vector.broadcast %49 : vector<8x1xf32> to vector<8x6xf32>
      %51 = arith.divf %47, %50 : vector<8x6xf32>
      %52 = tpu.iota {dimensions = array<i32: 1>} : vector<8x6xi32>
      %cst_34 = arith.constant dense<0xFF800000> : vector<8xf32>
      %53 = vector.multi_reduction <maximumf>, %51, %cst_34 [1] : vector<8x6xf32> to vector<8xf32>
      %54 = vector.shape_cast %53 : vector<8xf32> to vector<8x1xf32>
      %55 = vector.broadcast %54 : vector<8x1xf32> to vector<8x6xf32>
      %56 = arith.cmpf oge, %51, %55 : vector<8x6xf32>
      %c6_i32 = arith.constant 6 : i32
      %57 = vector.broadcast %c6_i32 : i32 to vector<8x6xi32>
      %58 = arith.select %56, %52, %57 : vector<8x6xi1>, vector<8x6xi32>
      %cst_35 = arith.constant dense<2147483647> : vector<8xi32>
      %59 = vector.multi_reduction <minsi>, %58, %cst_35 [1] : vector<8x6xi32> to vector<8xi32>
      %60 = vector.shape_cast %59 : vector<8xi32> to vector<8x1xi32>
      %61 = vector.broadcast %60 : vector<8x1xi32> to vector<8x6xi32>
      %62 = arith.cmpi eq, %52, %61 : vector<8x6xi32>
      %63 = arith.extui %62 : vector<8x6xi1> to vector<8x6xi32>
      %64 = arith.sitofp %63 : vector<8x6xi32> to vector<8x6xf32>
      %cst_36 = arith.constant 1.000000e+00 : f32
      %65 = vector.broadcast %cst_36 : f32 to vector<8x6xf32>
      %66 = arith.subf %65, %64 : vector<8x6xf32>
      %67 = arith.mulf %51, %66 : vector<8x6xf32>
      %cst_37 = arith.constant dense<0xFF800000> : vector<8xf32>
      %68 = vector.multi_reduction <maximumf>, %67, %cst_37 [1] : vector<8x6xf32> to vector<8xf32>
      %69 = vector.shape_cast %68 : vector<8xf32> to vector<8x1xf32>
      %70 = vector.broadcast %69 : vector<8x1xf32> to vector<8x6xf32>
      %71 = arith.cmpf oge, %67, %70 : vector<8x6xf32>
      %c6_i32_38 = arith.constant 6 : i32
      %72 = vector.broadcast %c6_i32_38 : i32 to vector<8x6xi32>
      %73 = arith.select %71, %52, %72 : vector<8x6xi1>, vector<8x6xi32>
      %cst_39 = arith.constant dense<2147483647> : vector<8xi32>
      %74 = vector.multi_reduction <minsi>, %73, %cst_39 [1] : vector<8x6xi32> to vector<8xi32>
      %75 = vector.shape_cast %74 : vector<8xi32> to vector<8x1xi32>
      %76 = vector.broadcast %75 : vector<8x1xi32> to vector<8x6xi32>
      %77 = arith.cmpi eq, %52, %76 : vector<8x6xi32>
      %78 = arith.extui %77 : vector<8x6xi1> to vector<8x6xi32>
      %79 = arith.sitofp %78 : vector<8x6xi32> to vector<8x6xf32>
      %80 = arith.addf %54, %69 : vector<8x1xf32>
      %cst_40 = arith.constant 9.99999971E-10 : f32
      %81 = vector.broadcast %cst_40 : f32 to vector<8x1xf32>
      %82 = arith.addf %80, %81 : vector<8x1xf32>
      %83 = arith.divf %54, %82 : vector<8x1xf32>
      %84 = arith.addf %83, %69 : vector<8x1xf32>
      %cst_41 = arith.constant 9.99999971E-10 : f32
      %85 = vector.broadcast %cst_41 : f32 to vector<8x1xf32>
      %86 = arith.addf %84, %85 : vector<8x1xf32>
      %87 = arith.divf %69, %86 : vector<8x1xf32>
      %cst_42 = arith.constant 2.000000e-01 : f32
      %88 = vector.broadcast %cst_42 : f32 to vector<8x1xf32>
      %89 = arith.cmpf ogt, %87, %88 : vector<8x1xf32>
      %90 = arith.extui %89 : vector<8x1xi1> to vector<8x1xi32>
      %91 = arith.sitofp %90 : vector<8x1xi32> to vector<8x1xf32>
      %92 = vector.broadcast %91 : vector<8x1xf32> to vector<8x6xf32>
      %93 = arith.mulf %79, %92 : vector<8x6xf32>
      %c0_43 = arith.constant 0 : index
      %c0_44 = arith.constant 0 : index
      %94 = vector.load %arg6[%c0_43, %c0_44] : memref<8x8xbf16, #tpu.memory_space<vmem>>, vector<8x8xbf16>
      %95 = tpu.concatenate %64, %93 in 1 : vector<8x6xf32>, vector<8x6xf32> -> vector<8x12xf32>
      %96 = arith.truncf %95 : vector<8x12xf32> to vector<8x12xbf16>
      %cst_45 = arith.constant dense<0.000000e+00> : vector<8x12xf32>
      %97 = tpu.matmul %94, %96, %cst_45 {dimension_numbers = #tpu.dot_dimension_numbers<[1], [0], [0], [1], [0, 0, 1, 1], [], []>} : vector<8x8xbf16>, vector<8x12xbf16>, vector<8x12xf32> -> vector<8x12xf32>
      %98 = vector.extract_strided_slice %97 {offsets = [0, 0], sizes = [8, 6], strides = [1, 1]} : vector<8x12xf32> to vector<8x6xf32>
      %99 = arith.mulf %98, %64 : vector<8x6xf32>
      %cst_46 = arith.constant 4.000000e+00 : f32
      %100 = vector.broadcast %cst_46 : f32 to vector<8x6xf32>
      %101 = arith.cmpf olt, %99, %100 : vector<8x6xf32>
      %102 = arith.extui %101 : vector<8x6xi1> to vector<8x6xi32>
      %103 = arith.sitofp %102 : vector<8x6xi32> to vector<8x6xf32>
      %104 = arith.mulf %64, %103 : vector<8x6xf32>
      %cst_47 = arith.constant dense<0.000000e+00> : vector<8xf32>
      %105 = vector.multi_reduction <add>, %104, %cst_47 [1] : vector<8x6xf32> to vector<8xf32>
      %106 = vector.shape_cast %105 : vector<8xf32> to vector<8x1xf32>
      %cst_48 = arith.constant dense<0.000000e+00> : vector<8xf32>
      %107 = vector.multi_reduction <add>, %99, %cst_48 [1] : vector<8x6xf32> to vector<8xf32>
      %108 = vector.shape_cast %107 : vector<8xf32> to vector<8x1xf32>
      %109 = arith.mulf %83, %106 : vector<8x1xf32>
      %cst_49 = arith.constant dense<0.000000e+00> : vector<6xf32>
      %110 = vector.multi_reduction <add>, %104, %cst_49 [0] : vector<8x6xf32> to vector<6xf32>
      %111 = vector.shape_cast %110 : vector<6xf32> to vector<1x6xf32>
      %112 = vector.extract_strided_slice %97 {offsets = [0, 6], sizes = [8, 6], strides = [1, 1]} : vector<8x12xf32> to vector<8x6xf32>
      %113 = vector.broadcast %111 : vector<1x6xf32> to vector<8x6xf32>
      %114 = arith.addf %112, %113 : vector<8x6xf32>
      %115 = arith.mulf %114, %93 : vector<8x6xf32>
      %cst_50 = arith.constant 4.000000e+00 : f32
      %116 = vector.broadcast %cst_50 : f32 to vector<8x6xf32>
      %117 = arith.cmpf olt, %115, %116 : vector<8x6xf32>
      %118 = arith.extui %117 : vector<8x6xi1> to vector<8x6xi32>
      %119 = arith.sitofp %118 : vector<8x6xi32> to vector<8x6xf32>
      %120 = arith.mulf %93, %119 : vector<8x6xf32>
      %cst_51 = arith.constant dense<0.000000e+00> : vector<8xf32>
      %121 = vector.multi_reduction <add>, %120, %cst_51 [1] : vector<8x6xf32> to vector<8xf32>
      %122 = vector.shape_cast %121 : vector<8xf32> to vector<8x1xf32>
      %cst_52 = arith.constant dense<0.000000e+00> : vector<8xf32>
      %123 = vector.multi_reduction <add>, %115, %cst_52 [1] : vector<8x6xf32> to vector<8xf32>
      %124 = vector.shape_cast %123 : vector<8xf32> to vector<8x1xf32>
      %125 = arith.mulf %87, %122 : vector<8x1xf32>
      %c8_i32 = arith.constant 8 : i32
      %126 = vector.broadcast %c8_i32 : i32 to vector<8x1xi32>
      %127 = arith.muli %60, %126 : vector<8x1xi32>
      %128 = arith.fptosi %108 : vector<8x1xf32> to vector<8x1xi32>
      %129 = arith.addi %127, %128 : vector<8x1xi32>
      %c8_i32_53 = arith.constant 8 : i32
      %130 = vector.broadcast %c8_i32_53 : i32 to vector<8x1xi32>
      %131 = arith.muli %75, %130 : vector<8x1xi32>
      %132 = arith.fptosi %124 : vector<8x1xf32> to vector<8x1xi32>
      %133 = arith.addi %131, %132 : vector<8x1xi32>
      %134 = arith.mulf %109, %106 : vector<8x1xf32>
      %135 = arith.mulf %125, %122 : vector<8x1xf32>
      %136 = tpu.iota {dimensions = array<i32: 0>} : vector<6x8x8xi32>
      %c8_i32_54 = arith.constant 8 : i32
      %137 = vector.broadcast %c8_i32_54 : i32 to vector<6x8x8xi32>
      %138 = arith.muli %136, %137 : vector<6x8x8xi32>
      %139 = tpu.iota {dimensions = array<i32: 2>} : vector<6x8x8xi32>
      %140 = arith.addi %138, %139 : vector<6x8x8xi32>
      %141 = vector.shape_cast %129 : vector<8x1xi32> to vector<1x8x1xi32>
      %142 = vector.broadcast %141 : vector<1x8x1xi32> to vector<6x8x8xi32>
      %143 = arith.cmpi eq, %140, %142 : vector<6x8x8xi32>
      %cst_55 = arith.constant 0.000000e+00 : f32
      %144 = vector.broadcast %cst_55 : f32 to vector<8x1xf32>
      %145 = arith.cmpf one, %134, %144 : vector<8x1xf32>
      %146 = vector.shape_cast %145 : vector<8x1xi1> to vector<1x8x1xi1>
      %147 = vector.broadcast %146 : vector<1x8x1xi1> to vector<6x8x8xi1>
      %148 = arith.andi %143, %147 : vector<6x8x8xi1>
      %149 = vector.shape_cast %133 : vector<8x1xi32> to vector<1x8x1xi32>
      %150 = vector.broadcast %149 : vector<1x8x1xi32> to vector<6x8x8xi32>
      %151 = arith.cmpi eq, %140, %150 : vector<6x8x8xi32>
      %cst_56 = arith.constant 0.000000e+00 : f32
      %152 = vector.broadcast %cst_56 : f32 to vector<8x1xf32>
      %153 = arith.cmpf one, %135, %152 : vector<8x1xf32>
      %154 = vector.shape_cast %153 : vector<8x1xi1> to vector<1x8x1xi1>
      %155 = vector.broadcast %154 : vector<1x8x1xi1> to vector<6x8x8xi1>
      %156 = arith.andi %151, %155 : vector<6x8x8xi1>
      %157 = arith.ori %148, %156 : vector<6x8x8xi1>
      %158 = arith.extui %157 : vector<6x8x8xi1> to vector<6x8x8xi32>
      %159 = arith.sitofp %158 : vector<6x8x8xi32> to vector<6x8x8xf32>
      %160 = arith.truncf %159 : vector<6x8x8xf32> to vector<6x8x8xbf16>
      %c0_57 = arith.constant 0 : index
      %c0_58 = arith.constant 0 : index
      %c0_59 = arith.constant 0 : index
      %161 = vector.load %arg10[%c0_57, %c0_58, %c0_59] : memref<6x8x8xbf16, #tpu.memory_space<vmem>>, vector<6x8x8xbf16>
      tpu.vector_store %arg10[%c0_57, %c0_58, %c0_59], %160 {strides = array<i32>} : memref<6x8x8xbf16, #tpu.memory_space<vmem>>, vector<6x8x8xbf16>,
      %162 = arith.sitofp %129 : vector<8x1xi32> to vector<8x1xf32>
      %163 = arith.sitofp %133 : vector<8x1xi32> to vector<8x1xf32>
      %164 = tpu.concatenate %162, %163, %134, %135 in 1 : vector<8x1xf32>, vector<8x1xf32>, vector<8x1xf32>, vector<8x1xf32> -> vector<8x4xf32>
      %165 = tpu.transpose %164, [1, 0] : vector<8x4xf32> -> vector<4x8xf32>
      %166 = vector.extract_strided_slice %165 {offsets = [0, 0], sizes = [1, 8], strides = [1, 1]} : vector<4x8xf32> to vector<1x8xf32>
      %167 = arith.fptosi %166 : vector<1x8xf32> to vector<1x8xi32>
      %168 = vector.shape_cast %167 : vector<1x8xi32> to vector<1x1x8xi32>
      %169 = vector.extract_strided_slice %165 {offsets = [1, 0], sizes = [1, 8], strides = [1, 1]} : vector<4x8xf32> to vector<1x8xf32>
      %170 = arith.fptosi %169 : vector<1x8xf32> to vector<1x8xi32>
      %171 = vector.shape_cast %170 : vector<1x8xi32> to vector<1x1x8xi32>
      %172 = vector.extract_strided_slice %165 {offsets = [2, 0], sizes = [1, 8], strides = [1, 1]} : vector<4x8xf32> to vector<1x8xf32>
      %173 = vector.shape_cast %172 : vector<1x8xf32> to vector<1x1x8xf32>
      %174 = vector.extract_strided_slice %165 {offsets = [3, 0], sizes = [1, 8], strides = [1, 1]} : vector<4x8xf32> to vector<1x8xf32>
      %175 = vector.shape_cast %174 : vector<1x8xf32> to vector<1x1x8xf32>
      %176 = tpu.iota {dimensions = array<i32: 0>} : vector<6x8x8xi32>
      %c8_i32_60 = arith.constant 8 : i32
      %177 = vector.broadcast %c8_i32_60 : i32 to vector<6x8x8xi32>
      %178 = arith.muli %176, %177 : vector<6x8x8xi32>
      %179 = tpu.iota {dimensions = array<i32: 1>} : vector<6x8x8xi32>
      %180 = arith.addi %178, %179 : vector<6x8x8xi32>
      %181 = vector.broadcast %168 : vector<1x1x8xi32> to vector<6x8x8xi32>
      %182 = arith.cmpi eq, %180, %181 : vector<6x8x8xi32>
      %cst_61 = arith.constant 0.000000e+00 : f32
      %183 = vector.broadcast %cst_61 : f32 to vector<1x1x8xf32>
      %184 = arith.cmpf one, %173, %183 : vector<1x1x8xf32>
      %185 = vector.broadcast %184 : vector<1x1x8xi1> to vector<6x8x8xi1>
      %186 = arith.andi %182, %185 : vector<6x8x8xi1>
      %187 = vector.broadcast %171 : vector<1x1x8xi32> to vector<6x8x8xi32>
      %188 = arith.cmpi eq, %180, %187 : vector<6x8x8xi32>
      %cst_62 = arith.constant 0.000000e+00 : f32
      %189 = vector.broadcast %cst_62 : f32 to vector<1x1x8xf32>
      %190 = arith.cmpf one, %175, %189 : vector<1x1x8xf32>
      %191 = vector.broadcast %190 : vector<1x1x8xi1> to vector<6x8x8xi1>
      %192 = arith.andi %188, %191 : vector<6x8x8xi1>
      %193 = arith.ori %186, %192 : vector<6x8x8xi1>
      %194 = arith.extui %193 : vector<6x8x8xi1> to vector<6x8x8xi32>
      %195 = arith.sitofp %194 : vector<6x8x8xi32> to vector<6x8x8xf32>
      %196 = arith.truncf %195 : vector<6x8x8xf32> to vector<6x8x8xbf16>
      %c0_63 = arith.constant 0 : index
      %c0_64 = arith.constant 0 : index
      %c0_65 = arith.constant 0 : index
      %197 = vector.load %arg9[%c0_63, %c0_64, %c0_65] : memref<6x8x8xbf16, #tpu.memory_space<vmem>>, vector<6x8x8xbf16>
      tpu.vector_store %arg9[%c0_63, %c0_64, %c0_65], %196 {strides = array<i32>} : memref<6x8x8xbf16, #tpu.memory_space<vmem>>, vector<6x8x8xbf16>,
      %cst_66 = arith.constant 0.000000e+00 : f32
      %198 = vector.shape_cast %173 : vector<1x1x8xf32> to vector<1x1x8xf32>
      %199 = vector.broadcast %198 : vector<1x1x8xf32> to vector<6x8x8xf32>
      %200 = vector.broadcast %cst_66 : f32 to vector<6x8x8xf32>
      %201 = arith.select %186, %199, %200 : vector<6x8x8xi1>, vector<6x8x8xf32>
      %cst_67 = arith.constant dense<0.000000e+00> : vector<6x8xf32>
      %202 = vector.multi_reduction <add>, %201, %cst_67 [2] : vector<6x8x8xf32> to vector<6x8xf32>
      %203 = vector.shape_cast %202 : vector<6x8xf32> to vector<6x8x1xf32>
      %cst_68 = arith.constant 0.000000e+00 : f32
      %204 = vector.shape_cast %175 : vector<1x1x8xf32> to vector<1x1x8xf32>
      %205 = vector.broadcast %204 : vector<1x1x8xf32> to vector<6x8x8xf32>
      %206 = vector.broadcast %cst_68 : f32 to vector<6x8x8xf32>
      %207 = arith.select %192, %205, %206 : vector<6x8x8xi1>, vector<6x8x8xf32>
      %cst_69 = arith.constant dense<0.000000e+00> : vector<6x8xf32>
      %208 = vector.multi_reduction <add>, %207, %cst_69 [2] : vector<6x8x8xf32> to vector<6x8xf32>
      %209 = vector.shape_cast %208 : vector<6x8xf32> to vector<6x8x1xf32>
      %210 = arith.addf %203, %209 : vector<6x8x1xf32>
      %c0_70 = arith.constant 0 : index
      %c0_71 = arith.constant 0 : index
      %c0_72 = arith.constant 0 : index
      %211 = vector.load %arg11[%c0_70, %c0_71, %c0_72] : memref<6x8x1xf32, #tpu.memory_space<vmem>>, vector<6x8x1xf32>
      tpu.vector_store %arg11[%c0_70, %c0_71, %c0_72], %210 {strides = array<i32>} : memref<6x8x1xf32, #tpu.memory_space<vmem>>, vector<6x8x1xf32>,
      %cst_73 = arith.constant 0.000000e+00 : f32
      %212 = vector.broadcast %cst_73 : f32 to vector<8x32xf32>
      %c0_74 = arith.constant 0 : index
      %c0_75 = arith.constant 0 : index
      %213 = vector.load %arg12[%c0_74, %c0_75] : memref<8x32xf32, #tpu.memory_space<vmem>>, vector<8x32xf32>
      tpu.vector_store %arg12[%c0_74, %c0_75], %212 {strides = array<i32>} : memref<8x32xf32, #tpu.memory_space<vmem>>, vector<8x32xf32>,
    } else {
    }
    %c0 = arith.constant 0 : index
    %c0_1 = arith.constant 0 : index
    %c0_2 = arith.constant 0 : index
    %3 = vector.load %arg4[%c0, %c0_1, %c0_2] : memref<1x32x128xbf16, #tpu.memory_space<vmem>>, vector<1x32x128xbf16>
    %4 = vector.shape_cast %3 : vector<1x32x128xbf16> to vector<32x128xbf16>
    %c0_3 = arith.constant 0 : index
    %c0_4 = arith.constant 0 : index
    %c0_5 = arith.constant 0 : index
    %5 = vector.load %arg5[%c0_3, %c0_4, %c0_5] : memref<1x128x32xbf16, #tpu.memory_space<vmem>>, vector<1x128x32xbf16>
    %6 = vector.shape_cast %5 : vector<1x128x32xbf16> to vector<128x32xbf16>
    %7 = arith.index_cast %arg1 : i32 to index
    %c0_6 = arith.constant 0 : index
    %c0_7 = arith.constant 0 : index
    %8 = vector.load %arg9[%7, %c0_6, %c0_7] : memref<6x8x8xbf16, #tpu.memory_space<vmem>>, vector<1x8x8xbf16>
    %9 = vector.shape_cast %8 : vector<1x8x8xbf16> to vector<8x8xbf16>
    %c0_8 = arith.constant 0 : index
    %c0_9 = arith.constant 0 : index
    %10 = vector.load %arg8[%c0_8, %c0_9] : memref<8x32xbf16, #tpu.memory_space<vmem>>, vector<8x32xbf16>
    %cst = arith.constant dense<0.000000e+00> : vector<8x32xf32>
    %11 = tpu.matmul %9, %10, %cst {dimension_numbers = #tpu.dot_dimension_numbers<[1], [0], [0], [1], [0, 0, 1, 1], [], []>} : vector<8x8xbf16>, vector<8x32xbf16>, vector<8x32xf32> -> vector<8x32xf32>
    %12 = arith.truncf %11 : vector<8x32xf32> to vector<8x32xbf16>
    %cst_10 = arith.constant dense<0.000000e+00> : vector<8x128xf32>
    %13 = tpu.matmul %12, %4, %cst_10 {dimension_numbers = #tpu.dot_dimension_numbers<[1], [0], [0], [1], [0, 0, 1, 1], [], []>} : vector<8x32xbf16>, vector<32x128xbf16>, vector<8x128xf32> -> vector<8x128xf32>
    %cst_11 = arith.constant 0.000000e+00 : f32
    %14 = vector.broadcast %cst_11 : f32 to vector<8x128xf32>
    %15 = arith.cmpf oge, %13, %14 : vector<8x128xf32>
    %cst_12 = arith.constant 0.00999999977 : f32
    %16 = vector.broadcast %cst_12 : f32 to vector<8x128xf32>
    %17 = arith.mulf %16, %13 : vector<8x128xf32>
    %18 = arith.select %15, %13, %17 : vector<8x128xi1>, vector<8x128xf32>
    %19 = arith.truncf %18 : vector<8x128xf32> to vector<8x128xbf16>
    %cst_13 = arith.constant dense<0.000000e+00> : vector<8x32xf32>
    %20 = tpu.matmul %19, %6, %cst_13 {dimension_numbers = #tpu.dot_dimension_numbers<[1], [0], [0], [1], [0, 0, 1, 1], [], []>} : vector<8x128xbf16>, vector<128x32xbf16>, vector<8x32xf32> -> vector<8x32xf32>
    %21 = arith.index_cast %arg1 : i32 to index
    %c0_14 = arith.constant 0 : index
    %c0_15 = arith.constant 0 : index
    %22 = vector.load %arg11[%21, %c0_14, %c0_15] : memref<6x8x1xf32, #tpu.memory_space<vmem>>, vector<1x8x1xf32>
    %23 = vector.shape_cast %22 : vector<1x8x1xf32> to vector<8x1xf32>
    %24 = vector.broadcast %23 : vector<8x1xf32> to vector<8x32xf32>
    %25 = arith.mulf %20, %24 : vector<8x32xf32>
    %c0_16 = arith.constant 0 : index
    %c0_17 = arith.constant 0 : index
    %26 = vector.load %arg12[%c0_16, %c0_17] : memref<8x32xf32, #tpu.memory_space<vmem>>, vector<8x32xf32>
    %27 = arith.index_cast %arg1 : i32 to index
    %c0_18 = arith.constant 0 : index
    %c0_19 = arith.constant 0 : index
    %28 = vector.load %arg10[%27, %c0_18, %c0_19] : memref<6x8x8xbf16, #tpu.memory_space<vmem>>, vector<1x8x8xbf16>
    %29 = vector.shape_cast %28 : vector<1x8x8xbf16> to vector<8x8xbf16>
    %30 = arith.truncf %25 : vector<8x32xf32> to vector<8x32xbf16>
    %cst_20 = arith.constant dense<0.000000e+00> : vector<8x32xf32>
    %31 = tpu.matmul %29, %30, %cst_20 {dimension_numbers = #tpu.dot_dimension_numbers<[1], [0], [0], [1], [0, 0, 1, 1], [], []>} : vector<8x8xbf16>, vector<8x32xbf16>, vector<8x32xf32> -> vector<8x32xf32>
    %32 = arith.addf %26, %31 : vector<8x32xf32>
    %c0_21 = arith.constant 0 : index
    %c0_22 = arith.constant 0 : index
    %33 = vector.load %arg12[%c0_21, %c0_22] : memref<8x32xf32, #tpu.memory_space<vmem>>, vector<8x32xf32>
    tpu.vector_store %arg12[%c0_21, %c0_22], %32 {strides = array<i32>} : memref<8x32xf32, #tpu.memory_space<vmem>>, vector<8x32xf32>,
    %c5_i32 = arith.constant 5 : i32
    %34 = arith.cmpi eq, %arg1, %c5_i32 : i32
    %35 = arith.extui %34 : i1 to i32
    %c0_i32_23 = arith.constant 0 : i32
    %36 = arith.cmpi ne, %35, %c0_i32_23 : i32
    scf.if %36 {
      %c0_24 = arith.constant 0 : index
      %c0_25 = arith.constant 0 : index
      %37 = vector.load %arg12[%c0_24, %c0_25] : memref<8x32xf32, #tpu.memory_space<vmem>>, vector<8x32xf32>
      %c0_26 = arith.constant 0 : index
      %c0_27 = arith.constant 0 : index
      %c0_28 = arith.constant 0 : index
      %38 = vector.load %arg7[%c0_26, %c0_27, %c0_28] : memref<1x8x32xf32, #tpu.memory_space<vmem>>, vector<1x8x32xf32>
      %39 = vector.shape_cast %38 : vector<1x8x32xf32> to vector<8x32xf32>
      %40 = vector.shape_cast %37 : vector<8x32xf32> to vector<1x8x32xf32>
      tpu.vector_store %arg7[%c0_26, %c0_27, %c0_28], %40 {strides = array<i32>} : memref<1x8x32xf32, #tpu.memory_space<vmem>>, vector<1x8x32xf32>,
    } else {
    }
    return
  }
  func.func @transform_0(%arg0: i32, %arg1: i32) -> (i32, i32, i32) {
    %c0_i32 = arith.constant 0 : i32
    %c0_i32_0 = arith.constant 0 : i32
    %c0_i32_1 = arith.constant 0 : i32
    return %arg0, %c0_i32, %c0_i32_0 : i32, i32, i32
  }
  func.func @transform_1(%arg0: i32, %arg1: i32) -> (i32, i32) {
    %c0_i32 = arith.constant 0 : i32
    %c0_i32_0 = arith.constant 0 : i32
    %c0_i32_1 = arith.constant 0 : i32
    return %c0_i32, %c0_i32_0 : i32, i32
  }
  func.func @transform_2(%arg0: i32, %arg1: i32) -> (i32, i32, i32) {
    %c0_i32 = arith.constant 0 : i32
    %c0_i32_0 = arith.constant 0 : i32
    %c0_i32_1 = arith.constant 0 : i32
    return %arg1, %c0_i32, %c0_i32_0 : i32, i32, i32
  }
  func.func @transform_3(%arg0: i32, %arg1: i32) -> (i32, i32, i32) {
    %c0_i32 = arith.constant 0 : i32
    %c0_i32_0 = arith.constant 0 : i32
    %c0_i32_1 = arith.constant 0 : i32
    return %arg1, %c0_i32, %c0_i32_0 : i32, i32, i32
  }
  func.func @transform_4(%arg0: i32, %arg1: i32) -> (i32, i32) {
    %c0_i32 = arith.constant 0 : i32
    %c0_i32_0 = arith.constant 0 : i32
    %c0_i32_1 = arith.constant 0 : i32
    return %c0_i32, %c0_i32_0 : i32, i32
  }
  func.func @transform_5(%arg0: i32, %arg1: i32) -> (i32, i32, i32) {
    %c0_i32 = arith.constant 0 : i32
    %c0_i32_0 = arith.constant 0 : i32
    %c0_i32_1 = arith.constant 0 : i32
    return %arg0, %c0_i32, %c0_i32_0 : i32, i32, i32
  }
}

</mosaic_0001>

<llo_original>
// kernel: tpu_custom_call.1
$region0: #{tpu_custom_call.1}
  #allocation0 [shape = 'u32[]', space=smem, size = 0x4, offset = 0x4, fixed_abs, tag = 'smem constant byte address 0x4 - core index']
  #allocation1 [shape = 'u32[144,128]{1,0:T(1,128)}', space=vmem, size = 0x12000, scoped, tag = 'internal scratch']
  #allocation2 [shape = 'bf16[8,32]{1,0:T(8,128)(2,1)}', space=vmem, size = 0x800, scoped, tag = 'scratch operand']
  #allocation3 [shape = 'bf16[6,8,8]{2,1,0:T(8,128)(2,1)}', space=vmem, size = 0x3000, scoped, tag = 'scratch operand']
  #allocation4 [shape = 'bf16[6,8,8]{2,1,0:T(8,128)(2,1)}', space=vmem, size = 0x3000, scoped, tag = 'scratch operand']
  #allocation5 [shape = 'f32[6,8,1]{2,1,0:T(8,128)}', space=vmem, size = 0x6000, scoped, tag = 'scratch operand']
  #allocation6 [shape = 'f32[8,32]{1,0:T(8,128)}', space=vmem, size = 0x1000, scoped, tag = 'scratch operand']
  %s0 = inlined_call_operand.vmem [shape: f32[2,8,32], index: 0, kind: input, shape index: {}]
  %s1 = inlined_call_operand.vmem [shape: f32[32,6], index: 1, kind: input, shape index: {}]
  %s2 = inlined_call_operand.vmem [shape: bf16[6,32,128], index: 2, kind: input, shape index: {}]
  %s3 = inlined_call_operand.vmem [shape: bf16[6,128,32], index: 3, kind: input, shape index: {}]
  %s4 = inlined_call_operand.vmem [shape: bf16[8,8], index: 4, kind: input, shape index: {}]
  %s5 = inlined_call_operand.hbm [shape: f32[2,8,32], index: 5, kind: output, shape index: {}]
  %s6 = sld [smem:[#allocation0]]
  $region61: #{tpu_custom_call.1} parent=0
    _
  %s8 = ssub.s32 1, %s6
  %s9 = scalar_select 0, %s8, %s6
  $region1: #{tpu_custom_call.1} parent=0
    #allocation7 [shape = 'u8[8192]{0}', space=vmem, size = 0x2000, scoped, tag = 'output window, operand 0']
    #allocation8 [shape = 's32[2]{0}', space=sflag, size = 0x8, scoped, tag = 'scoped memory for tpu_custom_call.1']
    %10 = vsyncpa [#allocation8], 0
    %s11 = scalar_lea.sflag [#allocation8], 1
    %12 = vsyncpa %s11, 0
    loop: start=0, step=1, limit=14
    $region2: #{tpu_custom_call.1} parent=1 // loop_pre_header
      _
    $region3: #{tpu_custom_call.1} parent=1 // loop_header
      %s14 = sphi 0, %s18
      %p15 = scmp.ge.s32.totalorder %s14, 14
      %s21 = sphi 0, %s33
      %s22 = sphi 0, %s29
      %s23 = sphi 0, %s21
      %s24 = sphi 0, %s22
      %s25 = sphi 0, %s23
      %s26 = sphi 0, %s24
      %s36 = sphi 0, %s38
      %s39 = sphi 0, %s36
      %s40 = sphi 0, %s39
      %s56 = sphi 0, %s40
      %s60 = sphi 0, %s60
      %s62 = sphi 0, %s60
      %s63 = sphi 0, %s62
      %s77 = sphi 0, %s63
      %s83 = sphi 0, %s85
      %s86 = sphi 0, %s83
      %s87 = sphi 0, %s86
      %s103 = sphi 0, %s87
      %s109 = sphi 0, %s111
      %s112 = sphi 0, %s109
      %s113 = sphi 0, %s112
      %s129 = sphi 0, %s113
      %s133 = sphi 0, %s133
      %s135 = sphi 0, %s133
      %s136 = sphi 0, %s135
      %s150 = sphi 0, %s136
      %s156 = sphi 0, %s158
      %s159 = sphi 0, %s156
      %s160 = sphi 0, %s159
      %s176 = sphi 0, %s160
    $region4: #{tpu_custom_call.1} parent=1 // loop_header_branch
      %17 = sbr.rel (%p15) target = $region8
    $region5: #{tpu_custom_call.1} parent=1 // loop_body
      %s19 = ssub.s32 %s14, 1
      %s20 = ssub.s32 %s14, 2
      %s27 = sadd.s32 1, %s22
      %p28 = scmp.ge.s32.totalorder %s27, 6
      %s29 = scalar_select %p28, 0, %s27
      %s30 = sadd.s32 1, %s21
      %s31 = scalar_select %p28, %s30, %s21
      %p32 = scmp.ge.s32.totalorder %s31, 2
      %s33 = scalar_select %p32, 0, %s31
      %s34 = ssub.s32 %s21, %s33
      %p35 = scmp.eq.s32.totalorder %s34, 0
      %s37 = sadd.s32 %s36, 1
      %s38 = scalar_select %p35, %s36, %s37
      %p41 = pneg %p35
      %p42 = scmp.eq.s32.totalorder %s14, 11
      %p43 = por %p41, %p42
      %p44 = scmp.ne.s32.totalorder %s36, %s39
      %p45 = scmp.eq.s32.totalorder %s14, 0
      %p46 = por %p44, %p45
      %p47 = scmp.ne.s32.totalorder %s36, %s39
      %p48 = scmp.eq.s32.totalorder %s19, 11
      %p49 = por %p47, %p48
      %p50 = scmp.ne.s32.totalorder %s39, %s40
      %p51 = scmp.eq.s32.totalorder %s19, 0
      %p52 = por %p50, %p51
      %p53 = scmp.ne.s32.totalorder %s39, %s40
      %p54 = scmp.eq.s32.totalorder %s20, 11
      %p55 = por %p53, %p54
      %p57 = scmp.ne.s32.totalorder %s40, %s56
      %p58 = scmp.eq.s32.totalorder %s20, 0
      %p59 = por %p57, %p58
      %s61 = sadd.s32 %s60, 1
      %p64 = scmp.eq.s32.totalorder %s14, 11
      %p65 = scmp.ne.s32.totalorder %s60, %s62
      %p66 = scmp.eq.s32.totalorder %s14, 0
      %p67 = por %p65, %p66
      %p68 = scmp.ne.s32.totalorder %s60, %s62
      %p69 = scmp.eq.s32.totalorder %s19, 11
      %p70 = por %p68, %p69
      %p71 = scmp.ne.s32.totalorder %s62, %s63
      %p72 = scmp.eq.s32.totalorder %s19, 0
      %p73 = por %p71, %p72
      %p74 = scmp.ne.s32.totalorder %s62, %s63
      %p75 = scmp.eq.s32.totalorder %s20, 11
      %p76 = por %p74, %p75
      %p78 = scmp.ne.s32.totalorder %s63, %s77
      %p79 = scmp.eq.s32.totalorder %s20, 0
      %p80 = por %p78, %p79
      %s81 = ssub.s32 %s22, %s29
      %p82 = scmp.eq.s32.totalorder %s81, 0
      %s84 = sadd.s32 %s83, 1
      %s85 = scalar_select %p82, %s83, %s84
      %p88 = pneg %p82
      %p89 = scmp.eq.s32.totalorder %s14, 11
      %p90 = por %p88, %p89
      %p91 = scmp.ne.s32.totalorder %s83, %s86
      %p92 = scmp.eq.s32.totalorder %s14, 0
      %p93 = por %p91, %p92
      %p94 = scmp.ne.s32.totalorder %s83, %s86
      %p95 = scmp.eq.s32.totalorder %s19, 11
      %p96 = por %p94, %p95
      %p97 = scmp.ne.s32.totalorder %s86, %s87
      %p98 = scmp.eq.s32.totalorder %s19, 0
      %p99 = por %p97, %p98
      %p100 = scmp.ne.s32.totalorder %s86, %s87
      %p101 = scmp.eq.s32.totalorder %s20, 11
      %p102 = por %p100, %p101
      %p104 = scmp.ne.s32.totalorder %s87, %s103
      %p105 = scmp.eq.s32.totalorder %s20, 0
      %p106 = por %p104, %p105
      %s107 = ssub.s32 %s22, %s29
      %p108 = scmp.eq.s32.totalorder %s107, 0
      %s110 = sadd.s32 %s109, 1
      %s111 = scalar_select %p108, %s109, %s110
      %p114 = pneg %p108
      %p115 = scmp.eq.s32.totalorder %s14, 11
      %p116 = por %p114, %p115
      %p117 = scmp.ne.s32.totalorder %s109, %s112
      %p118 = scmp.eq.s32.totalorder %s14, 0
      %p119 = por %p117, %p118
      %p120 = scmp.ne.s32.totalorder %s109, %s112
      %p121 = scmp.eq.s32.totalorder %s19, 11
      %p122 = por %p120, %p121
      %p123 = scmp.ne.s32.totalorder %s112, %s113
      %p124 = scmp.eq.s32.totalorder %s19, 0
      %p125 = por %p123, %p124
      %p126 = scmp.ne.s32.totalorder %s112, %s113
      %p127 = scmp.eq.s32.totalorder %s20, 11
      %p128 = por %p126, %p127
      %p130 = scmp.ne.s32.totalorder %s113, %s129
      %p131 = scmp.eq.s32.totalorder %s20, 0
      %p132 = por %p130, %p131
      %s134 = sadd.s32 %s133, 1
      %p137 = scmp.eq.s32.totalorder %s14, 11
      %p138 = scmp.ne.s32.totalorder %s133, %s135
      %p139 = scmp.eq.s32.totalorder %s14, 0
      %p140 = por %p138, %p139
      %p141 = scmp.ne.s32.totalorder %s133, %s135
      %p142 = scmp.eq.s32.totalorder %s19, 11
      %p143 = por %p141, %p142
      %p144 = scmp.ne.s32.totalorder %s135, %s136
      %p145 = scmp.eq.s32.totalorder %s19, 0
      %p146 = por %p144, %p145
      %p147 = scmp.ne.s32.totalorder %s135, %s136
      %p148 = scmp.eq.s32.totalorder %s20, 11
      %p149 = por %p147, %p148
      %p151 = scmp.ne.s32.totalorder %s136, %s150
      %p152 = scmp.eq.s32.totalorder %s20, 0
      %p153 = por %p151, %p152
      %s154 = ssub.s32 %s21, %s33
      %p155 = scmp.eq.s32.totalorder %s154, 0
      %s157 = sadd.s32 %s156, 1
      %s158 = scalar_select %p155, %s156, %s157
      %p161 = pneg %p155
      %p162 = scmp.eq.s32.totalorder %s14, 11
      %p163 = por %p161, %p162
      %p164 = scmp.ne.s32.totalorder %s156, %s159
      %p165 = scmp.eq.s32.totalorder %s14, 0
      %p166 = por %p164, %p165
      %p167 = scmp.ne.s32.totalorder %s156, %s159
      %p168 = scmp.eq.s32.totalorder %s19, 11
      %p169 = por %p167, %p168
      %p170 = scmp.ne.s32.totalorder %s159, %s160
      %p171 = scmp.eq.s32.totalorder %s19, 0
      %p172 = por %p170, %p171
      %p173 = scmp.ne.s32.totalorder %s159, %s160
      %p174 = scmp.eq.s32.totalorder %s20, 11
      %p175 = por %p173, %p174
      %p177 = scmp.ne.s32.totalorder %s160, %s176
      %p178 = scmp.eq.s32.totalorder %s20, 0
      %p179 = por %p177, %p178
      %p180 = scmp.le.s32.totalorder 1, %s14
      %p181 = scmp.lt.s32.totalorder %s14, 13
      %p182 = pnand %p180, %p181
      %p183 = pneg %p182
      // Predicated region
      $region9: #{tpu_custom_call.1} parent=5 // pred_check
        _
      $region10: #{tpu_custom_call.1} parent=5 // pred_check_branch
        %185 = sbr.rel (%p182) target = $region12
      $region11: #{tpu_custom_call.1} parent=5 // pred_region
        %s186 = ssub.s32 %s14, 1
        // Predicated region
        $region13: #{tpu_custom_call.1} parent=11 // pred_check
          %p187 = pneg %p73
        $region14: #{tpu_custom_call.1} parent=11 // pred_check_branch
          %189 = sbr.rel (%p187) target = $region16
        $region15: #{tpu_custom_call.1} parent=11 // pred_region
          _
        $region16: #{tpu_custom_call.1} parent=11 // pred_fallthru
          _
        // Predicated region
        $region17: #{tpu_custom_call.1} parent=11 // pred_check
          %p190 = pneg %p146
        $region18: #{tpu_custom_call.1} parent=11 // pred_check_branch
          %192 = sbr.rel (%p190) target = $region20
        $region19: #{tpu_custom_call.1} parent=11 // pred_region
          _
        $region20: #{tpu_custom_call.1} parent=11 // pred_fallthru
          _
      $region12: #{tpu_custom_call.1} parent=5 // pred_fallthru
        _
      %p193 = scmp.lt.s32.totalorder %s14, 12
      // Predicated region
      $region21: #{tpu_custom_call.1} parent=5 // pred_check
        %p194 = pneg %p193
      $region22: #{tpu_custom_call.1} parent=5 // pred_check_branch
        %196 = sbr.rel (%p194) target = $region24
      $region23: #{tpu_custom_call.1} parent=5 // pred_region
        // Predicated region
        $region25: #{tpu_custom_call.1} parent=23 // pred_check
          %p197 = pneg %p46
        $region26: #{tpu_custom_call.1} parent=23 // pred_check_branch
          %199 = sbr.rel (%p197) target = $region28
        $region27: #{tpu_custom_call.1} parent=23 // pred_region
          %p200 = scmp.lt.s32.totalorder %s21, 1
          %s201 = scalar_select %p200, %s21, 1
          %s202 = smul.addr %s201, 8
          %s203 = scalar_lea.vmem %s0, %s202
        $region28: #{tpu_custom_call.1} parent=23 // pred_fallthru
          _
        // Predicated region
        $region29: #{tpu_custom_call.1} parent=23 // pred_check
          %p204 = pneg %p93
        $region30: #{tpu_custom_call.1} parent=23 // pred_check_branch
          %206 = sbr.rel (%p204) target = $region32
        $region31: #{tpu_custom_call.1} parent=23 // pred_region
          %p207 = scmp.lt.s32.totalorder %s22, 5
          %s208 = scalar_select %p207, %s22, 5
          %s209 = smul.addr %s208, 4
          %s210 = smul.addr %s209, 4
          %s211 = scalar_lea.vmem %s2, %s210
        $region32: #{tpu_custom_call.1} parent=23 // pred_fallthru
          _
        // Predicated region
        $region33: #{tpu_custom_call.1} parent=23 // pred_check
          %p212 = pneg %p119
        $region34: #{tpu_custom_call.1} parent=23 // pred_check_branch
          %214 = sbr.rel (%p212) target = $region36
        $region35: #{tpu_custom_call.1} parent=23 // pred_region
          %p215 = scmp.lt.s32.totalorder %s22, 5
          %s216 = scalar_select %p215, %s22, 5
          %s217 = smul.addr %s216, 16
          %s218 = smul.addr %s217, 4
          %s219 = scalar_lea.vmem %s3, %s218
        $region36: #{tpu_custom_call.1} parent=23 // pred_fallthru
          _
      $region24: #{tpu_custom_call.1} parent=5 // pred_fallthru
        _
      %p220 = scmp.le.s32.totalorder 1, %s14
      %p221 = scmp.lt.s32.totalorder %s14, 13
      %p222 = pnand %p220, %p221
      %p223 = pneg %p222
      // Predicated region
      $region37: #{tpu_custom_call.1} parent=5 // pred_check
        _
      $region38: #{tpu_custom_call.1} parent=5 // pred_check_branch
        %225 = sbr.rel (%p222) target = $region40
      $region39: #{tpu_custom_call.1} parent=5 // pred_region
        %s226 = ssub.s32 %s14, 1
        %p227 = scmp.lt.s32.totalorder %s23, 1
        %s228 = scalar_select %p227, %s23, 1
        %s229 = smul.addr %s228, 8
        %s230 = scalar_lea.vmem %s0, %s229
        %p231 = pneg %p52
        %p232 = pneg %p49
        %p233 = pneg %p73
        %p234 = pneg %p70
        %p235 = scmp.lt.s32.totalorder %s24, 5
        %s236 = scalar_select %p235, %s24, 5
        %s237 = smul.addr %s236, 4
        %s238 = smul.addr %s237, 4
        %s239 = scalar_lea.vmem %s2, %s238
        %p240 = pneg %p99
        %p241 = pneg %p96
        %p242 = scmp.lt.s32.totalorder %s24, 5
        %s243 = scalar_select %p242, %s24, 5
        %s244 = smul.addr %s243, 16
        %s245 = smul.addr %s244, 4
        %s246 = scalar_lea.vmem %s3, %s245
        %p247 = pneg %p125
        %p248 = pneg %p122
        %p249 = pneg %p146
        %p250 = pneg %p143
        %p251 = pneg %p172
        %p252 = pneg %p169
        %s253 = sand.u32 %s159, 1
        %s254 = scalar_lea.sflag [#allocation8], %s253
        %s255 = sand.u32 %s159, 1
        %s256 = smul.addr %s255, 8
        %s257 = scalar_lea.vmem [#allocation7], %s256
        %p258 = scmp.lt.s32.totalorder %s23, 1
        %s259 = scalar_select %p258, %s23, 1
        %s260 = smul.addr %s259, 8
        %s261 = scalar_lea.vmem %s0, %s260
        %p262 = scmp.lt.s32.totalorder %s24, 5
        %s263 = scalar_select %p262, %s24, 5
        %s264 = smul.addr %s263, 4
        %s265 = smul.addr %s264, 4
        %s266 = scalar_lea.vmem %s2, %s265
        %p267 = scmp.lt.s32.totalorder %s24, 5
        %s268 = scalar_select %p267, %s24, 5
        %s269 = smul.addr %s268, 16
        %s270 = smul.addr %s269, 4
        %s271 = scalar_lea.vmem %s3, %s270
        %p273 = scmp.eq.s32.totalorder %s24, 0
        // Predicated region
        $region41: #{tpu_custom_call.1} parent=39 // pred_check
          %p274 = pneg %p273
        $region42: #{tpu_custom_call.1} parent=39 // pred_check_branch
          %276 = sbr.rel (%p274) target = $region44
        $region43: #{tpu_custom_call.1} parent=39 // pred_region
          %v277 = vld [vmem:[%s261] sm:$0xff]
          %v278 = vpack.c.bf16 %v277, %v277
          %vm279 = vcmask 257024
          %280 = vst.msk [vmem:[#allocation2] sm:$0xf] %vm279, %v278
          %v281 = vld [vmem:[%s1] sm:$0xff]
          %v282 = vld [vmem:[%s1 + $0x8] sm:$0xff]
          %v283 = vld [vmem:[%s1 + $0x10] sm:$0xff]
          %v284 = vld [vmem:[%s1 + $0x18] sm:$0xff]
          %vm285 = vcmask 261120
          %v287 = vsel %vm285, %v277, 0
          %289 = vmatprep.subr.mxu0 0.0
          %290 = vmatpush1.msra.mxu0 %v281
          %291 = vmatprep.subr.mxu0 0.0
          %292 = vmatpush1.msra.mxu0 %v282
          %293 = vmatprep.subr.mxu0 0.0
          %294 = vmatpush1.msra.mxu0 %v283
          %295 = vmatprep.subr.mxu0 0.0
          %296 = vmatpush1.msra.mxu0 %v284
          %297 = vmatprep.subr.mxu0 0.0
          %298 = vmatpush1.msra.mxu0 0.0
          %299 = vmatprep.subr.mxu0 0.0
          %300 = vmatpush1.msra.mxu0 0.0
          %301 = vmatprep.subr.mxu0 0.0
          %302 = vmatpush1.msra.mxu0 0.0
          %303 = vmatprep.subr.mxu0 0.0
          %304 = vmatpush1.msra.mxu0 0.0
          %305 = vmatprep.subr.mxu0 0.0
          %306 = vmatpush1.msra.mxu0 0.0
          %307 = vmatprep.subr.mxu0 0.0
          %308 = vmatpush1.msra.mxu0 0.0
          %309 = vmatprep.subr.mxu0 0.0
          %310 = vmatpush1.msra.mxu0 0.0
          %311 = vmatprep.subr.mxu0 0.0
          %312 = vmatpush1.msra.mxu0 0.0
          %313 = vmatprep.subr.mxu0 0.0
          %314 = vmatpush1.msra.mxu0 0.0
          %315 = vmatprep.subr.mxu0 0.0
          %316 = vmatpush1.msra.mxu0 0.0
          %317 = vmatprep.subr.mxu0 0.0
          %318 = vmatpush1.msra.mxu0 0.0
          %319 = vmatprep.subr.mxu0 0.0
          %320 = vmatpush1.msra.mxu0 0.0
          %321 = vmatprep.subr.mxu0 0.0
          %322 = vmatpush1.msra.mxu0 0.0
          %323 = vmatprep.subr.mxu0 0.0
          %324 = vmatpush1.msra.mxu0 0.0
          %325 = vmatprep.subr.mxu0 0.0
          %326 = vmatpush1.msra.mxu0 0.0
          %327 = vmatprep.subr.mxu0 0.0
          %328 = vmatpush1.msra.mxu0 0.0
          %329 = vmatprep.subr.mxu0 0.0
          %330 = vmatpush1.msra.mxu0 0.0
          %331 = vmatprep.subr.mxu0 0.0
          %332 = vmatpush1.msra.mxu0 0.0
          %333 = vmatprep.subr.mxu0 0.0
          %334 = vmatpush1.msra.mxu0 0.0
          %335 = vmatprep.subr.mxu0 0.0
          %336 = vmatpush1.msra.mxu0 0.0
          %337 = vmatprep.subr.mxu0 0.0
          %338 = vmatpush1.msra.mxu0 0.0
          %339 = vmatprep.subr.mxu0 0.0
          %340 = vmatpush1.msra.mxu0 0.0
          %341 = vmatprep.subr.mxu0 0.0
          %342 = vmatpush1.msra.mxu0 0.0
          %343 = vmatprep.subr.mxu0 0.0
          %344 = vmatpush1.msra.mxu0 0.0
          %345 = vmatprep.subr.mxu0 0.0
          %346 = vmatpush1.msra.mxu0 0.0
          %347 = vmatprep.subr.mxu0 0.0
          %348 = vmatpush1.msra.mxu0 0.0
          %349 = vmatprep.subr.mxu0 0.0
          %350 = vmatpush1.msra.mxu0 0.0
          %351 = vmatprep.subr.mxu0 0.0
          %352 = vmatpush1.msra.mxu0 0.0
          %353 = vmatprep.mubr.f32.mxu0 0.0
          %354 = vmatmul.mubr.f32.gmra.mrb[0].mxu0 %v287
          %v355 = vpop.f32.mrb[0].mxu0
          %v356 = vadd.f32 0.0, %v355
          %v357 = vpop.f32.mrb[0].mxu0
          %358 = vdwg.mxu0
          %vm359 = vcmask 48128
          %v360 = vsel %vm359, %v356, -inf
          %361 = vmax.xlane.f32.xlu0 %v360
          %v362 = vpop.xlane.xlu0 %361
          %v363 = vsub.f32 %v356, %v362
          %v364 = vmul.f32 %v363, 1.442695
          %v365 = vpow.pop %v364
          %v366 = vsel %vm359, %v365, 0.0
          %367 = vadd.xlane.f32.xlu0 %v366
          %v368 = vpop.xlane.xlu0 %367
          %v369 = vrcp.pop %v368
          %v370 = vmul.f32 %v365, %v369
          %v371 = vlaneseq
          %v372 = vand.u32 %v371, 127
          %v373 = vsel %vm359, %v370, -inf
          %374 = vmax.xlane.f32.xlu0 %v373
          %v375 = vpop.xlane.xlu0 %374
          %vm376 = vcmp.ge.f32.partialorder %v370, %v375
          %v377 = vsel %vm376, %v372, 6
          %v378 = vsel %vm359, %v377, 2147483647
          %v379 = vand.u32 %v378, 65535
          %v380 = vshra.s32 %v378, 16
          %v381 = vcvt.s32.f32 %v379
          %v382 = vcvt.s32.f32 %v380
          %383 = vmin.xlane.f32.xlu0 %v382
          %v384 = vpop.xlane.xlu0 %383
          %vm385 = vcmp.eq.f32.partialorder %v382, %v384
          %v386 = vsel %vm385, %v381, inf
          %387 = vmin.xlane.f32.xlu0 %v386
          %v388 = vpop.xlane.xlu0 %387
          %v389 = vcvt.f32.s32 %v388
          %v390 = vcvt.f32.s32 %v384
          %v391 = vshll.u32 %v390, 16
          %v392 = vadd.s32 %v391, %v389
          %vm393 = vcmp.eq.s32.totalorder %v372, %v392
          %v394 = vsel %vm393, 1, 0
          %v395 = vcvt.s32.f32 %v394
          %v396 = vsub.f32 1.0, %v395
          %v397 = vmul.f32 %v370, %v396
          %v398 = vsel %vm359, %v397, -inf
          %399 = vmax.xlane.f32.xlu0 %v398
          %v400 = vpop.xlane.xlu0 %399
          %vm401 = vcmp.ge.f32.partialorder %v397, %v400
          %v402 = vsel %vm401, %v372, 6
          %v403 = vsel %vm359, %v402, 2147483647
          %v404 = vand.u32 %v403, 65535
          %v405 = vshra.s32 %v403, 16
          %v406 = vcvt.s32.f32 %v404
          %v407 = vcvt.s32.f32 %v405
          %408 = vmin.xlane.f32.xlu0 %v407
          %v409 = vpop.xlane.xlu0 %408
          %vm410 = vcmp.eq.f32.partialorder %v407, %v409
          %v411 = vsel %vm410, %v406, inf
          %412 = vmin.xlane.f32.xlu0 %v411
          %v413 = vpop.xlane.xlu0 %412
          %v414 = vcvt.f32.s32 %v413
          %v415 = vcvt.f32.s32 %v409
          %v416 = vshll.u32 %v415, 16
          %v417 = vadd.s32 %v416, %v414
          %vm418 = vcmp.eq.s32.totalorder %v372, %v417
          %v419 = vsel %vm418, 1, 0
          %v420 = vcvt.s32.f32 %v419
          %v421 = vadd.f32 %v375, %v400
          %v422 = vadd.f32 %v421, 1e-09
          %v423 = vrcp.pop %v422
          %v424 = vmul.f32 %v375, %v423
          %v425 = vadd.f32 %v424, %v400
          %v426 = vadd.f32 %v425, 1e-09
          %v427 = vrcp.pop %v426
          %v428 = vmul.f32 %v400, %v427
          %vm429 = vcmp.gt.f32.partialorder %v428, 0.2
          %v430 = vsel %vm429, 1, 0
          %v431 = vcvt.s32.f32 %v430
          %v432 = vmul.f32 %v420, %v431
          %v433 = vld [vmem:[%s4] sm:$0xf]
          %435 = vrot.lane.b32.xlu0 %v432, 6
          %v436 = vpop.permute.xlu0 %435
          %v438 = vsel %vm359, %v395, %v436
          %v439 = vpack.c.bf16 %v438, %v438
          %vm440 = vcmask 64512
          %v442 = vsel %vm440, %v433, 0
          %vm444 = vcmask 1043456
          %v446 = vsel %vm444, %v439, 0
          %448 = vmatprep.subr.bf16.mxu0 0
          %449 = vmatpush1.bf16.msra.mxu0 %v446
          %450 = vmatprep.subr.bf16.mxu0 0
          %451 = vmatpush1.bf16.msra.mxu0 0
          %452 = vmatprep.subr.bf16.mxu0 0
          %453 = vmatpush1.bf16.msra.mxu0 0
          %454 = vmatprep.subr.bf16.mxu0 0
          %455 = vmatpush1.bf16.msra.mxu0 0
          %456 = vmatprep.subr.bf16.mxu0 0
          %457 = vmatpush1.bf16.msra.mxu0 0
          %458 = vmatprep.subr.bf16.mxu0 0
          %459 = vmatpush1.bf16.msra.mxu0 0
          %460 = vmatprep.subr.bf16.mxu0 0
          %461 = vmatpush1.bf16.msra.mxu0 0
          %462 = vmatprep.subr.bf16.mxu0 0
          %463 = vmatpush1.bf16.msra.mxu0 0
          %464 = vmatprep.subr.bf16.mxu0 0
          %465 = vmatpush1.bf16.msra.mxu0 0
          %466 = vmatprep.subr.bf16.mxu0 0
          %467 = vmatpush1.bf16.msra.mxu0 0
          %468 = vmatprep.subr.bf16.mxu0 0
          %469 = vmatpush1.bf16.msra.mxu0 0
          %470 = vmatprep.subr.bf16.mxu0 0
          %471 = vmatpush1.bf16.msra.mxu0 0
          %472 = vmatprep.subr.bf16.mxu0 0
          %473 = vmatpush1.bf16.msra.mxu0 0
          %474 = vmatprep.subr.bf16.mxu0 0
          %475 = vmatpush1.bf16.msra.mxu0 0
          %476 = vmatprep.subr.bf16.mxu0 0
          %477 = vmatpush1.bf16.msra.mxu0 0
          %478 = vmatprep.subr.bf16.mxu0 0
          %479 = vmatpush1.bf16.msra.mxu0 0
          %480 = vmatprep.mubr.bf16.mxu0 0
          %481 = vmatmul.mubr.bf16.gmra.mrb[0].mxu0 %v442
          %v482 = vpop.f32.mrb[0].mxu0
          %v483 = vadd.f32 0.0, %v482
          %v484 = vpop.f32.mrb[0].mxu0
          %v485 = vpop.f32.mrb[0].mxu0
          %v486 = vpop.f32.mrb[0].mxu0
          %487 = vdwg.mxu0
          %v488 = vmul.f32 %v483, %v395
          %vm489 = vcmp.lt.f32.partialorder %v488, 4.0
          %v490 = vsel %vm489, 1, 0
          %v491 = vcvt.s32.f32 %v490
          %v492 = vmul.f32 %v395, %v491
          %v493 = vsel %vm359, %v492, 0.0
          %494 = vadd.xlane.f32.xlu0 %v493
          %v495 = vpop.xlane.xlu0 %494
          %v496 = vsel %vm359, %v488, 0.0
          %497 = vadd.xlane.f32.xlu0 %v496
          %v498 = vpop.xlane.xlu0 %497
          %v499 = vmul.f32 %v424, %v495
          %v500 = vrot.slane %v493, 4
          %v501 = vadd.f32 %v493, %v500
          %v502 = vrot.slane %v501, 2
          %v503 = vadd.f32 %v501, %v502
          %v504 = vrot.slane %v503, 1
          %v505 = vadd.f32 %v503, %v504
          %507 = vrot.lane.b32.xlu0 %v505, 6
          %v508 = vpop.permute.xlu0 %507
          %v510 = vadd.f32 %v483, %v508
          %v511 = vmul.f32 %v510, %v436
          %vm512 = vcmp.lt.f32.partialorder %v511, 4.0
          %v513 = vsel %vm512, 1, 0
          %v514 = vcvt.s32.f32 %v513
          %516 = vrot.lane.b32.xlu0 %v514, 122
          %v517 = vpop.permute.xlu0 %516
          %v519 = vmul.f32 %v432, %v517
          %v520 = vsel %vm359, %v519, 0.0
          %521 = vadd.xlane.f32.xlu0 %v520
          %v522 = vpop.xlane.xlu0 %521
          %524 = vrot.lane.b32.xlu0 %v511, 122
          %v525 = vpop.permute.xlu0 %524
          %v527 = vsel %vm359, %v525, 0.0
          %528 = vadd.xlane.f32.xlu0 %v527
          %v529 = vpop.xlane.xlu0 %528
          %v530 = vmul.f32 %v428, %v522
          %v531 = vmul.u32 %v392, 8
          %v532 = vcvt.f32.s32.to.zero.pseudo %v498
          %v533 = vadd.s32 %v531, %v532
          %v534 = vmul.u32 %v417, 8
          %v535 = vcvt.f32.s32.to.zero.pseudo %v529
          %v536 = vadd.s32 %v534, %v535
          %v537 = vmul.f32 %v499, %v495
          %v538 = vmul.f32 %v530, %v522
          %v539 = vadd.s32 %v372, 8
          %v540 = vadd.s32 %v372, 16
          %v541 = vadd.s32 %v372, 24
          %v542 = vadd.s32 %v372, 32
          %v543 = vadd.s32 %v372, 40
          %vm544 = vcmp.eq.s32.totalorder %v372, %v533
          %vm545 = vcmp.eq.s32.totalorder %v539, %v533
          %vm546 = vcmp.eq.s32.totalorder %v540, %v533
          %vm547 = vcmp.eq.s32.totalorder %v541, %v533
          %vm548 = vcmp.eq.s32.totalorder %v542, %v533
          %vm549 = vcmp.eq.s32.totalorder %v543, %v533
          %vm550 = vcmp.ne.f32.partialorder %v537, 0.0
          %v551 = vsel %vm550, 1, 0
          %vm552 = vcmp.eq.s32.totalorder %v551, 1
          %vm553 = vmand %vm544, %vm552
          %vm554 = vmand %vm545, %vm552
          %vm555 = vmand %vm546, %vm552
          %vm556 = vmand %vm547, %vm552
          %vm557 = vmand %vm548, %vm552
          %vm558 = vmand %vm549, %vm552
          %vm559 = vcmp.eq.s32.totalorder %v372, %v536
          %vm560 = vcmp.eq.s32.totalorder %v539, %v536
          %vm561 = vcmp.eq.s32.totalorder %v540, %v536
          %vm562 = vcmp.eq.s32.totalorder %v541, %v536
          %vm563 = vcmp.eq.s32.totalorder %v542, %v536
          %vm564 = vcmp.eq.s32.totalorder %v543, %v536
          %vm565 = vcmp.ne.f32.partialorder %v538, 0.0
          %v566 = vsel %vm565, 1, 0
          %vm567 = vcmp.eq.s32.totalorder %v566, 1
          %vm568 = vmand %vm559, %vm567
          %vm569 = vmand %vm560, %vm567
          %vm570 = vmand %vm561, %vm567
          %vm571 = vmand %vm562, %vm567
          %vm572 = vmand %vm563, %vm567
          %vm573 = vmand %vm564, %vm567
          %vm574 = vmor %vm553, %vm568
          %vm575 = vmor %vm554, %vm569
          %vm576 = vmor %vm555, %vm570
          %vm577 = vmor %vm556, %vm571
          %vm578 = vmor %vm557, %vm572
          %vm579 = vmor %vm558, %vm573
          %v580 = vsel %vm574, 1, 0
          %v581 = vsel %vm575, 1, 0
          %v582 = vsel %vm576, 1, 0
          %v583 = vsel %vm577, 1, 0
          %v584 = vsel %vm578, 1, 0
          %v585 = vsel %vm579, 1, 0
          %v586 = vcvt.s32.f32 %v580
          %v587 = vcvt.s32.f32 %v581
          %v588 = vcvt.s32.f32 %v582
          %v589 = vcvt.s32.f32 %v583
          %v590 = vcvt.s32.f32 %v584
          %v591 = vcvt.s32.f32 %v585
          %v592 = vpack.c.bf16 %v586, %v586
          %v593 = vpack.c.bf16 %v587, %v587
          %v594 = vpack.c.bf16 %v588, %v588
          %v595 = vpack.c.bf16 %v589, %v589
          %v596 = vpack.c.bf16 %v590, %v590
          %v597 = vpack.c.bf16 %v591, %v591
          %vm598 = vcmask 60416
          %599 = vst.msk [vmem:[#allocation4] sm:$0xf] %vm598, %v592
          %600 = vst.msk [vmem:[#allocation4 + $0x4] sm:$0xf] %vm598, %v593
          %601 = vst.msk [vmem:[#allocation4 + $0x8] sm:$0xf] %vm598, %v594
          %602 = vst.msk [vmem:[#allocation4 + $0xc] sm:$0xf] %vm598, %v595
          %603 = vst.msk [vmem:[#allocation4 + $0x10] sm:$0xf] %vm598, %v596
          %604 = vst.msk [vmem:[#allocation4 + $0x14] sm:$0xf] %vm598, %v597
          %v605 = vcvt.s32.f32 %v533
          %v606 = vcvt.s32.f32 %v536
          %vm607 = vcmask 7168
          %v608 = vsel %vm607, %v605, %v606
          %vm609 = vcmask 15360
          %v610 = vsel %vm609, %v608, %v537
          %vm611 = vcmask 23552
          %v612 = vsel %vm611, %v610, %v538
          %613 = vxpose.xlu0.b32.start [1/16] %v612, 128
          %614 = vxpose.xlu0.b32.cont [2/16] 0.0, 128
          %615 = vxpose.xlu0.b32.cont [3/16] 0.0, 128
          %616 = vxpose.xlu0.b32.cont [4/16] 0.0, 128
          %617 = vxpose.xlu0.b32.cont [5/16] 0.0, 128
          %618 = vxpose.xlu0.b32.cont [6/16] 0.0, 128
          %619 = vxpose.xlu0.b32.cont [7/16] 0.0, 128
          %620 = vxpose.xlu0.b32.cont [8/16] 0.0, 128
          %621 = vxpose.xlu0.b32.cont [9/16] 0.0, 128
          %622 = vxpose.xlu0.b32.cont [10/16] 0.0, 128
          %623 = vxpose.xlu0.b32.cont [11/16] 0.0, 128
          %624 = vxpose.xlu0.b32.cont [12/16] 0.0, 128
          %625 = vxpose.xlu0.b32.cont [13/16] 0.0, 128
          %626 = vxpose.xlu0.b32.cont [14/16] 0.0, 128
          %627 = vxpose.xlu0.b32.cont [15/16] 0.0, 128
          %628 = vxpose.xlu0.b32.end [16/16] 0.0, 128
          %v629 = vpop.trf.xlu0
          %v630 = vpop.trf.xlu0
          %v631 = vpop.trf.xlu0
          %v632 = vpop.trf.xlu0
          %v633 = vpop.trf.xlu0
          %v634 = vpop.trf.xlu0
          %v635 = vpop.trf.xlu0
          %v636 = vpop.trf.xlu0
          %v637 = vpop.trf.xlu0
          %v638 = vpop.trf.xlu0
          %v639 = vpop.trf.xlu0
          %v640 = vpop.trf.xlu0
          %v641 = vpop.trf.xlu0
          %v642 = vpop.trf.xlu0
          %v643 = vpop.trf.xlu0
          %v644 = vpop.trf.xlu0
          %v645 = vcvt.f32.s32.to.zero.pseudo %v629
          %v646 = vlaneseq
          %v647 = vshrl.u32 %v646, 7
          %v648 = vadd.s32 %v647, 8
          %v649 = vadd.s32 %v647, 16
          %v650 = vadd.s32 %v647, 24
          %v651 = vadd.s32 %v647, 32
          %v652 = vadd.s32 %v647, 40
          %v653 = vlaneseq
          %v654 = vshrl.u32 %v653, 7
          %v655 = vsub.s32 0, %v654
          %v656 = vrot.slane %v645, %v655
          %vm657 = vcmp.eq.s32.totalorder %v647, %v656
          %vm658 = vcmp.eq.s32.totalorder %v648, %v656
          %vm659 = vcmp.eq.s32.totalorder %v649, %v656
          %vm660 = vcmp.eq.s32.totalorder %v650, %v656
          %vm661 = vcmp.eq.s32.totalorder %v651, %v656
          %vm662 = vcmp.eq.s32.totalorder %v652, %v656
          %vm663 = vcmp.ne.f32.partialorder %v629, 0.0
          %v664 = vsel %vm663, 1, 0
          %v665 = vlaneseq
          %v666 = vshrl.u32 %v665, 7
          %v667 = vsub.s32 2, %v666
          %v668 = vrot.slane %v664, %v667
          %vm669 = vcmp.eq.s32.totalorder %v668, 1
          %vm670 = vmand %vm657, %vm669
          %vm671 = vmand %vm658, %vm669
          %vm672 = vmand %vm659, %vm669
          %vm673 = vmand %vm660, %vm669
          %vm674 = vmand %vm661, %vm669
          %vm675 = vmand %vm662, %vm669
          %v676 = vlaneseq
          %v677 = vshrl.u32 %v676, 7
          %v678 = vsub.s32 1, %v677
          %v679 = vrot.slane %v645, %v678
          %vm680 = vcmp.eq.s32.totalorder %v647, %v679
          %vm681 = vcmp.eq.s32.totalorder %v648, %v679
          %vm682 = vcmp.eq.s32.totalorder %v649, %v679
          %vm683 = vcmp.eq.s32.totalorder %v650, %v679
          %vm684 = vcmp.eq.s32.totalorder %v651, %v679
          %vm685 = vcmp.eq.s32.totalorder %v652, %v679
          %v686 = vlaneseq
          %v687 = vshrl.u32 %v686, 7
          %v688 = vsub.s32 3, %v687
          %v689 = vrot.slane %v664, %v688
          %vm690 = vcmp.eq.s32.totalorder %v689, 1
          %vm691 = vmand %vm680, %vm690
          %vm692 = vmand %vm681, %vm690
          %vm693 = vmand %vm682, %vm690
          %vm694 = vmand %vm683, %vm690
          %vm695 = vmand %vm684, %vm690
          %vm696 = vmand %vm685, %vm690
          %vm697 = vmor %vm670, %vm691
          %vm698 = vmor %vm671, %vm692
          %vm699 = vmor %vm672, %vm693
          %vm700 = vmor %vm673, %vm694
          %vm701 = vmor %vm674, %vm695
          %vm702 = vmor %vm675, %vm696
          %v703 = vsel %vm697, 1, 0
          %v704 = vsel %vm698, 1, 0
          %v705 = vsel %vm699, 1, 0
          %v706 = vsel %vm700, 1, 0
          %v707 = vsel %vm701, 1, 0
          %v708 = vsel %vm702, 1, 0
          %v709 = vcvt.s32.f32 %v703
          %v710 = vcvt.s32.f32 %v704
          %v711 = vcvt.s32.f32 %v705
          %v712 = vcvt.s32.f32 %v706
          %v713 = vcvt.s32.f32 %v707
          %v714 = vcvt.s32.f32 %v708
          %v715 = vpack.c.bf16 %v709, %v709
          %v716 = vpack.c.bf16 %v710, %v710
          %v717 = vpack.c.bf16 %v711, %v711
          %v718 = vpack.c.bf16 %v712, %v712
          %v719 = vpack.c.bf16 %v713, %v713
          %v720 = vpack.c.bf16 %v714, %v714
          %721 = vst.msk [vmem:[#allocation3] sm:$0xf] %vm598, %v715
          %722 = vst.msk [vmem:[#allocation3 + $0x4] sm:$0xf] %vm598, %v716
          %723 = vst.msk [vmem:[#allocation3 + $0x8] sm:$0xf] %vm598, %v717
          %724 = vst.msk [vmem:[#allocation3 + $0xc] sm:$0xf] %vm598, %v718
          %725 = vst.msk [vmem:[#allocation3 + $0x10] sm:$0xf] %vm598, %v719
          %726 = vst.msk [vmem:[#allocation3 + $0x14] sm:$0xf] %vm598, %v720
          %v727 = vlaneseq
          %v728 = vshrl.u32 %v727, 7
          %v729 = vsub.s32 2, %v728
          %v730 = vrot.slane %v629, %v729
          %v731 = vsel %vm670, %v730, 0.0
          %v732 = vsel %vm671, %v730, 0.0
          %v733 = vsel %vm672, %v730, 0.0
          %v734 = vsel %vm673, %v730, 0.0
          %v735 = vsel %vm674, %v730, 0.0
          %v736 = vsel %vm675, %v730, 0.0
          %v737 = vsel %vm440, %v731, 0.0
          %738 = vadd.xlane.f32.xlu0 %v737
          %v739 = vpop.xlane.xlu0 %738
          %v740 = vsel %vm440, %v732, 0.0
          %741 = vadd.xlane.f32.xlu0 %v740
          %v742 = vpop.xlane.xlu0 %741
          %v743 = vsel %vm440, %v733, 0.0
          %744 = vadd.xlane.f32.xlu0 %v743
          %v745 = vpop.xlane.xlu0 %744
          %v746 = vsel %vm440, %v734, 0.0
          %747 = vadd.xlane.f32.xlu0 %v746
          %v748 = vpop.xlane.xlu0 %747
          %v749 = vsel %vm440, %v735, 0.0
          %750 = vadd.xlane.f32.xlu0 %v749
          %v751 = vpop.xlane.xlu0 %750
          %v752 = vsel %vm440, %v736, 0.0
          %753 = vadd.xlane.f32.xlu0 %v752
          %v754 = vpop.xlane.xlu0 %753
          %v755 = vlaneseq
          %v756 = vshrl.u32 %v755, 7
          %v757 = vsub.s32 3, %v756
          %v758 = vrot.slane %v629, %v757
          %v759 = vsel %vm691, %v758, 0.0
          %v760 = vsel %vm692, %v758, 0.0
          %v761 = vsel %vm693, %v758, 0.0
          %v762 = vsel %vm694, %v758, 0.0
          %v763 = vsel %vm695, %v758, 0.0
          %v764 = vsel %vm696, %v758, 0.0
          %v765 = vsel %vm440, %v759, 0.0
          %766 = vadd.xlane.f32.xlu0 %v765
          %v767 = vpop.xlane.xlu0 %766
          %v768 = vsel %vm440, %v760, 0.0
          %769 = vadd.xlane.f32.xlu0 %v768
          %v770 = vpop.xlane.xlu0 %769
          %v771 = vsel %vm440, %v761, 0.0
          %772 = vadd.xlane.f32.xlu0 %v771
          %v773 = vpop.xlane.xlu0 %772
          %v774 = vsel %vm440, %v762, 0.0
          %775 = vadd.xlane.f32.xlu0 %v774
          %v776 = vpop.xlane.xlu0 %775
          %v777 = vsel %vm440, %v763, 0.0
          %778 = vadd.xlane.f32.xlu0 %v777
          %v779 = vpop.xlane.xlu0 %778
          %v780 = vsel %vm440, %v764, 0.0
          %781 = vadd.xlane.f32.xlu0 %v780
          %v782 = vpop.xlane.xlu0 %781
          %v783 = vadd.f32 %v739, %v767
          %v784 = vadd.f32 %v742, %v770
          %v785 = vadd.f32 %v745, %v773
          %v786 = vadd.f32 %v748, %v776
          %v787 = vadd.f32 %v751, %v779
          %v788 = vadd.f32 %v754, %v782
          %789 = vst.msk [vmem:[#allocation5] sm:$0xff] %vm607, %v783
          %790 = vst.msk [vmem:[#allocation5 + $0x8] sm:$0xff] %vm607, %v784
          %791 = vst.msk [vmem:[#allocation5 + $0x10] sm:$0xff] %vm607, %v785
          %792 = vst.msk [vmem:[#allocation5 + $0x18] sm:$0xff] %vm607, %v786
          %793 = vst.msk [vmem:[#allocation5 + $0x20] sm:$0xff] %vm607, %v787
          %794 = vst.msk [vmem:[#allocation5 + $0x28] sm:$0xff] %vm607, %v788
          %795 = vst.msk [vmem:[#allocation6] sm:$0xff] %vm285, 0.0
        $region44: #{tpu_custom_call.1} parent=39 // pred_fallthru
          _
        %v796 = vld [vmem:[%s266] sm:$0xf]
        %v797 = vld [vmem:[%s266 + $0x4] sm:$0xf]
        %v798 = vld [vmem:[%s266 + $0x8] sm:$0xf]
        %v799 = vld [vmem:[%s266 + $0xc] sm:$0xf]
        %v800 = vld [vmem:[%s271] sm:$0xf]
        %v801 = vld [vmem:[%s271 + $0x4] sm:$0xf]
        %v802 = vld [vmem:[%s271 + $0x8] sm:$0xf]
        %v803 = vld [vmem:[%s271 + $0xc] sm:$0xf]
        %v804 = vld [vmem:[%s271 + $0x10] sm:$0xf]
        %v805 = vld [vmem:[%s271 + $0x14] sm:$0xf]
        %v806 = vld [vmem:[%s271 + $0x18] sm:$0xf]
        %v807 = vld [vmem:[%s271 + $0x1c] sm:$0xf]
        %v808 = vld [vmem:[%s271 + $0x20] sm:$0xf]
        %v809 = vld [vmem:[%s271 + $0x24] sm:$0xf]
        %v810 = vld [vmem:[%s271 + $0x28] sm:$0xf]
        %v811 = vld [vmem:[%s271 + $0x2c] sm:$0xf]
        %v812 = vld [vmem:[%s271 + $0x30] sm:$0xf]
        %v813 = vld [vmem:[%s271 + $0x34] sm:$0xf]
        %v814 = vld [vmem:[%s271 + $0x38] sm:$0xf]
        %v815 = vld [vmem:[%s271 + $0x3c] sm:$0xf]
        %s816 = smul.addr %s24, 4
        %s817 = scalar_lea.vmem [#allocation3], %s816
        %v818 = vld [vmem:[%s817] sm:$0xf]
        %v819 = vld [vmem:[#allocation2] sm:$0xf]
        %vm820 = vcmask 64512
        %v822 = vsel %vm820, %v818, 0
        %vm824 = vcmask 1043456
        %v826 = vsel %vm824, %v819, 0
        %828 = vmatprep.subr.bf16.mxu0 0
        %829 = vmatpush1.bf16.msra.mxu0 %v826
        %830 = vmatprep.subr.bf16.mxu0 0
        %831 = vmatpush1.bf16.msra.mxu0 0
        %832 = vmatprep.subr.bf16.mxu0 0
        %833 = vmatpush1.bf16.msra.mxu0 0
        %834 = vmatprep.subr.bf16.mxu0 0
        %835 = vmatpush1.bf16.msra.mxu0 0
        %836 = vmatprep.subr.bf16.mxu0 0
        %837 = vmatpush1.bf16.msra.mxu0 0
        %838 = vmatprep.subr.bf16.mxu0 0
        %839 = vmatpush1.bf16.msra.mxu0 0
        %840 = vmatprep.subr.bf16.mxu0 0
        %841 = vmatpush1.bf16.msra.mxu0 0
        %842 = vmatprep.subr.bf16.mxu0 0
        %843 = vmatpush1.bf16.msra.mxu0 0
        %844 = vmatprep.subr.bf16.mxu0 0
        %845 = vmatpush1.bf16.msra.mxu0 0
        %846 = vmatprep.subr.bf16.mxu0 0
        %847 = vmatpush1.bf16.msra.mxu0 0
        %848 = vmatprep.subr.bf16.mxu0 0
        %849 = vmatpush1.bf16.msra.mxu0 0
        %850 = vmatprep.subr.bf16.mxu0 0
        %851 = vmatpush1.bf16.msra.mxu0 0
        %852 = vmatprep.subr.bf16.mxu0 0
        %853 = vmatpush1.bf16.msra.mxu0 0
        %854 = vmatprep.subr.bf16.mxu0 0
        %855 = vmatpush1.bf16.msra.mxu0 0
        %856 = vmatprep.subr.bf16.mxu0 0
        %857 = vmatpush1.bf16.msra.mxu0 0
        %858 = vmatprep.subr.bf16.mxu0 0
        %859 = vmatpush1.bf16.msra.mxu0 0
        %860 = vmatprep.mubr.bf16.mxu0 0
        %861 = vmatmul.mubr.bf16.gmra.mrb[0].mxu0 %v822
        %v862 = vpop.f32.mrb[0].mxu0
        %v863 = vadd.f32 0.0, %v862
        %v864 = vpop.f32.mrb[0].mxu0
        %v865 = vpop.f32.mrb[0].mxu0
        %v866 = vpop.f32.mrb[0].mxu0
        %867 = vdwg.mxu0
        %v868 = vpack.c.bf16 %v863, %v863
        %v873 = vunpack.c.l.b16 %v796
        %v874 = vunpack.c.l.b16 %v797
        %v875 = vunpack.c.l.b16 %v798
        %v876 = vunpack.c.l.b16 %v799
        %v877 = vpack.c.b16 %v874, %v873
        %v878 = vpack.c.b16 %v876, %v875
        %vm881 = vcmask 261120
        %v883 = vsel %vm881, %v868, 0
        %885 = vmatprep.subr.bf16.mxu0 0
        %886 = vmatpush1.bf16.msra.mxu0 %v877
        %887 = vmatprep.subr.bf16.mxu0 0
        %888 = vmatpush1.bf16.msra.mxu0 %v878
        %889 = vmatprep.subr.bf16.mxu0 0
        %890 = vmatpush1.bf16.msra.mxu0 0
        %891 = vmatprep.subr.bf16.mxu0 0
        %892 = vmatpush1.bf16.msra.mxu0 0
        %893 = vmatprep.subr.bf16.mxu0 0
        %894 = vmatpush1.bf16.msra.mxu0 0
        %895 = vmatprep.subr.bf16.mxu0 0
        %896 = vmatpush1.bf16.msra.mxu0 0
        %897 = vmatprep.subr.bf16.mxu0 0
        %898 = vmatpush1.bf16.msra.mxu0 0
        %899 = vmatprep.subr.bf16.mxu0 0
        %900 = vmatpush1.bf16.msra.mxu0 0
        %901 = vmatprep.subr.bf16.mxu0 0
        %902 = vmatpush1.bf16.msra.mxu0 0
        %903 = vmatprep.subr.bf16.mxu0 0
        %904 = vmatpush1.bf16.msra.mxu0 0
        %905 = vmatprep.subr.bf16.mxu0 0
        %906 = vmatpush1.bf16.msra.mxu0 0
        %907 = vmatprep.subr.bf16.mxu0 0
        %908 = vmatpush1.bf16.msra.mxu0 0
        %909 = vmatprep.subr.bf16.mxu0 0
        %910 = vmatpush1.bf16.msra.mxu0 0
        %911 = vmatprep.subr.bf16.mxu0 0
        %912 = vmatpush1.bf16.msra.mxu0 0
        %913 = vmatprep.subr.bf16.mxu0 0
        %914 = vmatpush1.bf16.msra.mxu0 0
        %915 = vmatprep.subr.bf16.mxu0 0
        %916 = vmatpush1.bf16.msra.mxu0 0
        %917 = vmatprep.mubr.bf16.mxu0 0
        %918 = vmatmul.mubr.bf16.gmra.mrb[0].mxu0 %v883
        %v919 = vpop.f32.mrb[0].mxu0
        %v920 = vadd.f32 0.0, %v919
        %v921 = vpop.f32.mrb[0].mxu0
        %v922 = vpop.f32.mrb[0].mxu0
        %v923 = vpop.f32.mrb[0].mxu0
        %924 = vdwg.mxu0
        %vm925 = vcmp.ge.f32.partialorder %v920, 0.0
        %v926 = vmul.f32 %v920, 0.01
        %v927 = vsel %vm925, %v920, %v926
        %v928 = vpack.c.bf16 %v927, %v927
        %v945 = vunpack.c.l.b16 %v800
        %v946 = vunpack.c.l.b16 %v801
        %v947 = vunpack.c.l.b16 %v802
        %v948 = vunpack.c.l.b16 %v803
        %v949 = vunpack.c.l.b16 %v804
        %v950 = vunpack.c.l.b16 %v805
        %v951 = vunpack.c.l.b16 %v806
        %v952 = vunpack.c.l.b16 %v807
        %v953 = vunpack.c.l.b16 %v808
        %v954 = vunpack.c.l.b16 %v809
        %v955 = vunpack.c.l.b16 %v810
        %v956 = vunpack.c.l.b16 %v811
        %v957 = vunpack.c.l.b16 %v812
        %v958 = vunpack.c.l.b16 %v813
        %v959 = vunpack.c.l.b16 %v814
        %v960 = vunpack.c.l.b16 %v815
        %v961 = vpack.c.b16 %v946, %v945
        %v962 = vpack.c.b16 %v948, %v947
        %v963 = vpack.c.b16 %v950, %v949
        %v964 = vpack.c.b16 %v952, %v951
        %v965 = vpack.c.b16 %v954, %v953
        %v966 = vpack.c.b16 %v956, %v955
        %v967 = vpack.c.b16 %v958, %v957
        %v968 = vpack.c.b16 %v960, %v959
        %977 = vmatprep.subr.bf16.mxu0 0
        %978 = vmatpush1.bf16.msra.mxu0 %v961
        %979 = vmatprep.subr.bf16.mxu0 0
        %980 = vmatpush1.bf16.msra.mxu0 %v962
        %981 = vmatprep.subr.bf16.mxu0 0
        %982 = vmatpush1.bf16.msra.mxu0 %v963
        %983 = vmatprep.subr.bf16.mxu0 0
        %984 = vmatpush1.bf16.msra.mxu0 %v964
        %985 = vmatprep.subr.bf16.mxu0 0
        %986 = vmatpush1.bf16.msra.mxu0 %v965
        %987 = vmatprep.subr.bf16.mxu0 0
        %988 = vmatpush1.bf16.msra.mxu0 %v966
        %989 = vmatprep.subr.bf16.mxu0 0
        %990 = vmatpush1.bf16.msra.mxu0 %v967
        %991 = vmatprep.subr.bf16.mxu0 0
        %992 = vmatpush1.bf16.msra.mxu0 %v968
        %993 = vmatprep.subr.bf16.mxu0 0
        %994 = vmatpush1.bf16.msra.mxu0 0
        %995 = vmatprep.subr.bf16.mxu0 0
        %996 = vmatpush1.bf16.msra.mxu0 0
        %997 = vmatprep.subr.bf16.mxu0 0
        %998 = vmatpush1.bf16.msra.mxu0 0
        %999 = vmatprep.subr.bf16.mxu0 0
        %1000 = vmatpush1.bf16.msra.mxu0 0
        %1001 = vmatprep.subr.bf16.mxu0 0
        %1002 = vmatpush1.bf16.msra.mxu0 0
        %1003 = vmatprep.subr.bf16.mxu0 0
        %1004 = vmatpush1.bf16.msra.mxu0 0
        %1005 = vmatprep.subr.bf16.mxu0 0
        %1006 = vmatpush1.bf16.msra.mxu0 0
        %1007 = vmatprep.subr.bf16.mxu0 0
        %1008 = vmatpush1.bf16.msra.mxu0 0
        %1009 = vmatprep.mubr.bf16.mxu0 0
        %1010 = vmatmul.mubr.bf16.gmra.mrb[0].mxu0 %v928
        %v1011 = vpop.f32.mrb[0].mxu0
        %v1012 = vadd.f32 0.0, %v1011
        %v1013 = vpop.f32.mrb[0].mxu0
        %v1014 = vpop.f32.mrb[0].mxu0
        %v1015 = vpop.f32.mrb[0].mxu0
        %1016 = vdwg.mxu0
        %s1017 = smul.u32 %s24, 8
        %s1018 = scalar_lea.vmem [#allocation5], %s1017
        %v1019 = vld [vmem:[%s1018] sm:$0xff]
        %1021 = vset.pattern.permute.xlu0 0
        %1022 = vperm.xlu0 %1021, %v1019
        %v1023 = vpop.permute.xlu0 %1022
        %v1025 = vmul.f32 %v1012, %v1023
        %v1026 = vld [vmem:[#allocation6] sm:$0xff]
        %s1027 = smul.addr %s24, 4
        %s1028 = scalar_lea.vmem [#allocation4], %s1027
        %v1029 = vld [vmem:[%s1028] sm:$0xf]
        %v1030 = vpack.c.bf16 %v1025, %v1025
        %v1032 = vsel %vm820, %v1029, 0
        %v1035 = vsel %vm824, %v1030, 0
        %1037 = vmatprep.subr.bf16.mxu0 0
        %1038 = vmatpush1.bf16.msra.mxu0 %v1035
        %1039 = vmatprep.subr.bf16.mxu0 0
        %1040 = vmatpush1.bf16.msra.mxu0 0
        %1041 = vmatprep.subr.bf16.mxu0 0
        %1042 = vmatpush1.bf16.msra.mxu0 0
        %1043 = vmatprep.subr.bf16.mxu0 0
        %1044 = vmatpush1.bf16.msra.mxu0 0
        %1045 = vmatprep.subr.bf16.mxu0 0
        %1046 = vmatpush1.bf16.msra.mxu0 0
        %1047 = vmatprep.subr.bf16.mxu0 0
        %1048 = vmatpush1.bf16.msra.mxu0 0
        %1049 = vmatprep.subr.bf16.mxu0 0
        %1050 = vmatpush1.bf16.msra.mxu0 0
        %1051 = vmatprep.subr.bf16.mxu0 0
        %1052 = vmatpush1.bf16.msra.mxu0 0
        %1053 = vmatprep.subr.bf16.mxu0 0
        %1054 = vmatpush1.bf16.msra.mxu0 0
        %1055 = vmatprep.subr.bf16.mxu0 0
        %1056 = vmatpush1.bf16.msra.mxu0 0
        %1057 = vmatprep.subr.bf16.mxu0 0
        %1058 = vmatpush1.bf16.msra.mxu0 0
        %1059 = vmatprep.subr.bf16.mxu0 0
        %1060 = vmatpush1.bf16.msra.mxu0 0
        %1061 = vmatprep.subr.bf16.mxu0 0
        %1062 = vmatpush1.bf16.msra.mxu0 0
        %1063 = vmatprep.subr.bf16.mxu0 0
        %1064 = vmatpush1.bf16.msra.mxu0 0
        %1065 = vmatprep.subr.bf16.mxu0 0
        %1066 = vmatpush1.bf16.msra.mxu0 0
        %1067 = vmatprep.subr.bf16.mxu0 0
        %1068 = vmatpush1.bf16.msra.mxu0 0
        %1069 = vmatprep.mubr.bf16.mxu0 0
        %1070 = vmatmul.mubr.bf16.gmra.mrb[0].mxu0 %v1032
        %v1071 = vpop.f32.mrb[0].mxu0
        %v1072 = vadd.f32 0.0, %v1071
        %v1073 = vpop.f32.mrb[0].mxu0
        %v1074 = vpop.f32.mrb[0].mxu0
        %v1075 = vpop.f32.mrb[0].mxu0
        %1076 = vdwg.mxu0
        %v1077 = vadd.f32 %v1026, %v1072
        %1078 = vst.msk [vmem:[#allocation6] sm:$0xff] %vm881, %v1077
        %p1079 = scmp.eq.s32.totalorder %s24, 5
        // Predicated region
        $region45: #{tpu_custom_call.1} parent=39 // pred_check
          %p1080 = pneg %p1079
        $region46: #{tpu_custom_call.1} parent=39 // pred_check_branch
          %1082 = sbr.rel (%p1080) target = $region48
        $region47: #{tpu_custom_call.1} parent=39 // pred_region
          %v1083 = vld [vmem:[#allocation6] sm:$0xff]
          %1084 = vst.msk [vmem:[%s257] sm:$0xff] %vm881, %v1083
        $region48: #{tpu_custom_call.1} parent=39 // pred_fallthru
          _
        %s1085 = sand.u32 %s159, 1
        %s1086 = scalar_lea.sflag [#allocation8], %s1085
        %s1087 = sand.u32 %s159, 1
        %s1088 = smul.addr %s1087, 8
        %s1089 = scalar_lea.vmem [#allocation7], %s1088
        // Predicated region
        $region49: #{tpu_custom_call.1} parent=39 // pred_check
          %p1090 = pneg %p169
        $region50: #{tpu_custom_call.1} parent=39 // pred_check_branch
          %1092 = sbr.rel (%p1090) target = $region52
        $region51: #{tpu_custom_call.1} parent=39 // pred_region
          %s1094 = ssub.s32 128, 128
          %1095 = vsyncadd %s1086, %s1094
          %s1096 = smul.addr %s23, 128
          %s1097 = scalar_lea.hbm %s5, %s1096
          %s1099 = sshll.u32 %s1089, 4
          %s1100 = int_to_ptr.vmem [resolvable:$true] %s1099
          %1102 = dma.vmem_to_hbm [thread:$0]  %s1100, 128, %s1097, %s1086
        $region52: #{tpu_custom_call.1} parent=39 // pred_fallthru
          _
      $region40: #{tpu_custom_call.1} parent=5 // pred_fallthru
        _
      %p1103 = scmp.le.s32.totalorder 2, %s14
      // Predicated region
      $region53: #{tpu_custom_call.1} parent=5 // pred_check
        %p1104 = pneg %p1103
      $region54: #{tpu_custom_call.1} parent=5 // pred_check_branch
        %1106 = sbr.rel (%p1104) target = $region56
      $region55: #{tpu_custom_call.1} parent=5 // pred_region
        %s1107 = ssub.s32 %s14, 2
        // Predicated region
        $region57: #{tpu_custom_call.1} parent=55 // pred_check
          %p1108 = pneg %p175
        $region58: #{tpu_custom_call.1} parent=55 // pred_check_branch
          %1110 = sbr.rel (%p1108) target = $region60
        $region59: #{tpu_custom_call.1} parent=55 // pred_region
          %s1111 = sand.u32 %s160, 1
          %s1112 = scalar_lea.sflag [#allocation8], %s1111
          %s1113 = sand.u32 %s160, 1
          %s1114 = smul.addr %s1113, 8
          %s1115 = scalar_lea.vmem [#allocation7], %s1114
          %1116 = dma.done %s1112, 128
        $region60: #{tpu_custom_call.1} parent=55 // pred_fallthru
          _
      $region56: #{tpu_custom_call.1} parent=5 // pred_fallthru
        _
    $region6: #{tpu_custom_call.1} parent=1 // loop_footer
      %s18 = sadd.s32 1, %s14
    $region7: #{tpu_custom_call.1} parent=1 // loop_footer_branch
      %13 = sbr.rel target = $region3
    $region8: #{tpu_custom_call.1} parent=1 // loop_exit
      _
    %1117 = vsyncpa [#allocation8], 1
    %s1118 = scalar_lea.sflag [#allocation8], 1
    %1119 = vsyncpa %s1118, 1

</llo_original>
